<compile_context>
chip_gen: v7x
topology: tpu7x:2x2x1
jax: 0.10.0
libtpu: 0.0.40
codegen_flags: <defaults>
</compile_context>

<pallas_src>
import functools
import math

import jax
import jax.numpy as jnp
from jax import lax
from jax.experimental import pallas as pl
from jax.experimental.pallas import tpu as pltpu


# ----------------------------------------------------------------------------
# Small helpers
# ----------------------------------------------------------------------------
def _round_up(x, m):
    return ((x + m - 1) // m) * m


def _row_block(m, target=128):
    return min(target, _round_up(m, 8))


def _col_tile(n, target=512):
    """Largest multiple-of-128 divisor of n that is <= target, else full n."""
    if n <= target:
        return n
    t = (target // 128) * 128
    while t >= 128:
        if n % t == 0:
            return t
        t -= 128
    # TODO(synk): N dims with no 128-multiple divisor (e.g. I=8640) should be padded.
    return n


def _pad_rows(x, bm):
    m = x.shape[0]
    mp = _round_up(m, bm)
    if mp != m:
        x = jnp.pad(x, ((0, mp - m), (0, 0)))
    return x


def _cp(dim_sem):
    # TODO(synk): derive the VMEM budget per generation (v5e/v6e can go ~100 MiB);
    # 48 MiB leaves headroom on v7x (64 MiB physical) and is fine everywhere.
    return pltpu.CompilerParams(
        dimension_semantics=dim_sem,
        vmem_limit_bytes=48 * 1024 * 1024,
    )


# ----------------------------------------------------------------------------
# Shared in-kernel math
# ----------------------------------------------------------------------------
def _rms_normalize(x, gamma, eps):
    var = jnp.mean(x * x, axis=-1, keepdims=True)
    return x * lax.rsqrt(var + eps) * gamma


def _quant_act(x):
    """Per-token absmax quantization.  Returns (x_q as bf16 exact ints in
    [-128,127], dequant multiplier = absmax / 127)."""
    absmax = jnp.maximum(jnp.max(jnp.abs(x), axis=-1, keepdims=True), 1e-5)
    x_q = jnp.clip(jnp.round(x * (127.0 / absmax)), -128.0, 127.0)
    return x_q.astype(jnp.bfloat16), absmax * (1.0 / 127.0)


def _ternary_matmul(x_q, w_ref):
    # int8 ternary weights upcast to bf16 in-kernel (exact; halves weight HBM/VMEM).
    # TODO(synk): feed the MXU int8 x int8 on v5e/v6e (~2x rate); v7x has no int path.
    w = w_ref[...].astype(jnp.bfloat16)
    return jnp.dot(x_q, w, preferred_element_type=jnp.float32)


def _rotate_half(x):
    d = x.shape[-1]
    x1 = x[:, : d // 2]
    x2 = x[:, d // 2:]
    return jnp.concatenate([-x2, x1], axis=-1)


# ----------------------------------------------------------------------------
# Kernels
# ----------------------------------------------------------------------------
def _rmsnorm_kernel(x_ref, g_ref, o_ref, *, eps):
    x = x_ref[...].astype(jnp.float32)
    o_ref[...] = _rms_normalize(x, g_ref[...], eps).astype(o_ref.dtype)


def _norm_bitlinear_kernel(x_ref, g_ref, w_ref, s_ref, o_ref, *, eps):
    """RMSNorm -> act quant -> ternary matmul (N-tiled weight) -> rescale."""
    x = x_ref[...].astype(jnp.float32)
    xn = _rms_normalize(x, g_ref[...], eps)
    xq, dq = _quant_act(xn)
    y = _ternary_matmul(xq, w_ref)
    o_ref[...] = (y * s_ref[...] * dq).astype(o_ref.dtype)


def _norm_gated_mlp_kernel(x_ref, g_ref, wg_ref, sg_ref, wu_ref, su_ref, o_ref, *, eps):
    """RMSNorm -> act quant -> BitLinear gate & up (shared quant) -> SiLU(gate)*up."""
    x = x_ref[...].astype(jnp.float32)
    xn = _rms_normalize(x, g_ref[...], eps)
    xq, dq = _quant_act(xn)
    gate = _ternary_matmul(xq, wg_ref) * (sg_ref[...] * dq)
    up = _ternary_matmul(xq, wu_ref) * (su_ref[...] * dq)
    o_ref[...] = (gate * jax.nn.sigmoid(gate) * up).astype(o_ref.dtype)


def _bitlinear_res_kernel(x_ref, w_ref, s_ref, res_ref, o_ref):
    """act quant -> ternary matmul (N-tiled weight) -> rescale -> + residual."""
    x = x_ref[...].astype(jnp.float32)
    xq, dq = _quant_act(x)
    y = _ternary_matmul(xq, w_ref)
    o_ref[...] = res_ref[...] + y * s_ref[...] * dq


def _attention_kernel(q_ref, k_ref, v_ref, cos_ref, sin_ref, o_ref, *, scale):
    """One (batch, head) per grid step: in-kernel RoPE + causal softmax attention."""
    cos = cos_ref[...]
    sin = sin_ref[...]
    q = q_ref[...].astype(jnp.float32)
    k = k_ref[...].astype(jnp.float32)
    q = (q * cos + _rotate_half(q) * sin).astype(jnp.bfloat16)   # bf16 MXU operands
    k = (k * cos + _rotate_half(k) * sin).astype(jnp.bfloat16)
    s = lax.dot_general(q, k, (((1,), (1,)), ((), ())),
                        preferred_element_type=jnp.float32) * scale
    n = s.shape[0]
    row = lax.broadcasted_iota(jnp.int32, (n, n), 0)
    col = lax.broadcasted_iota(jnp.int32, (n, n), 1)
    s = jnp.where(col <= row, s, -1e30)            # python float -> no captured const
    m = jnp.max(s, axis=-1, keepdims=True)
    p = jnp.exp(s - m)
    probs = p / jnp.sum(p, axis=-1, keepdims=True)  # exact softmax (reviewer note)
    out = jnp.dot(probs.astype(jnp.bfloat16), v_ref[...].astype(jnp.bfloat16),
                  preferred_element_type=jnp.float32)
    o_ref[...] = out.astype(o_ref.dtype)
    # TODO(synk): lane-dense (H*Dh) output blocking for Dh=64 on v6e.


# ----------------------------------------------------------------------------
# Wrappers (pallas_call plumbing)
# ----------------------------------------------------------------------------
def rmsnorm(x, gamma, eps, block_rows=128):
    m, d = x.shape
    bm = _row_block(m, block_rows)
    xp = _pad_rows(x, bm)
    mp = xp.shape[0]
    out = pl.pallas_call(
        functools.partial(_rmsnorm_kernel, eps=eps),
        out_shape=jax.ShapeDtypeStruct((mp, d), jnp.float32),
        grid=(mp // bm,),
        in_specs=[pl.BlockSpec((bm, d), lambda i: (i, 0)),
                  pl.BlockSpec((1, d), lambda i: (0, 0))],
        out_specs=pl.BlockSpec((bm, d), lambda i: (i, 0)),
        compiler_params=_cp(("parallel",)),
    )(xp, gamma.reshape(1, d))
    return out[:m]


def norm_bitlinear(x, gamma, wq, col_scale, eps, *, out_dtype=jnp.bfloat16,
                   block_rows=128, block_cols=512):
    """x:(M,K) f32, wq:(K,N) int8 ternary, col_scale:(1,N) f32 -> (M,N)."""
    m, k = x.shape
    n = wq.shape[1]
    bm = _row_block(m, block_rows)
    tn = _col_tile(n, block_cols)
    xp = _pad_rows(x, bm)
    mp = xp.shape[0]
    out = pl.pallas_call(
        functools.partial(_norm_bitlinear_kernel, eps=eps),
        out_shape=jax.ShapeDtypeStruct((mp, n), out_dtype),
        grid=(mp // bm, n // tn),
        in_specs=[pl.BlockSpec((bm, k), lambda i, j: (i, 0)),
                  pl.BlockSpec((1, k), lambda i, j: (0, 0)),
                  pl.BlockSpec((k, tn), lambda i, j: (0, j)),
                  pl.BlockSpec((1, tn), lambda i, j: (0, j))],
        out_specs=pl.BlockSpec((bm, tn), lambda i, j: (i, j)),
        compiler_params=_cp(("parallel", "parallel")),
    )(xp, gamma.reshape(1, k), wq, col_scale)
    return out[:m]


def norm_gated_mlp(x, gamma, wq_g, s_g, wq_u, s_u, eps, *,
                   block_rows=128, block_cols=512):
    """SiLU(gate(rmsnorm(x))) * up(rmsnorm(x)), weights N-tiled over intermediate dim."""
    m, d = x.shape
    n = wq_g.shape[1]
    bm = _row_block(m, block_rows)
    tn = _col_tile(n, block_cols)
    xp = _pad_rows(x, bm)
    mp = xp.shape[0]
    out = pl.pallas_call(
        functools.partial(_norm_gated_mlp_kernel, eps=eps),
        out_shape=jax.ShapeDtypeStruct((mp, n), jnp.bfloat16),
        grid=(mp // bm, n // tn),
        in_specs=[pl.BlockSpec((bm, d), lambda i, j: (i, 0)),
                  pl.BlockSpec((1, d), lambda i, j: (0, 0)),
                  pl.BlockSpec((d, tn), lambda i, j: (0, j)),
                  pl.BlockSpec((1, tn), lambda i, j: (0, j)),
                  pl.BlockSpec((d, tn), lambda i, j: (0, j)),
                  pl.BlockSpec((1, tn), lambda i, j: (0, j))],
        out_specs=pl.BlockSpec((bm, tn), lambda i, j: (i, j)),
        compiler_params=_cp(("parallel", "parallel")),
    )(xp, gamma.reshape(1, d), wq_g, s_g, wq_u, s_u)
    return out[:m]


def bitlinear_residual(x, wq, col_scale, residual, *, block_rows=128, block_cols=512):
    """residual + BitLinear(x).  x:(M,K), wq:(K,N) int8, residual:(M,N) f32."""
    m, k = x.shape
    n = wq.shape[1]
    bm = _row_block(m, block_rows)
    tn = _col_tile(n, block_cols)
    xp = _pad_rows(x, bm)
    rp = _pad_rows(residual, bm)
    mp = xp.shape[0]
    out = pl.pallas_call(
        _bitlinear_res_kernel,
        out_shape=jax.ShapeDtypeStruct((mp, n), jnp.float32),
        grid=(mp // bm, n // tn),
        in_specs=[pl.BlockSpec((bm, k), lambda i, j: (i, 0)),
                  pl.BlockSpec((k, tn), lambda i, j: (0, j)),
                  pl.BlockSpec((1, tn), lambda i, j: (0, j)),
                  pl.BlockSpec((bm, tn), lambda i, j: (i, j))],
        out_specs=pl.BlockSpec((bm, tn), lambda i, j: (i, j)),
        compiler_params=_cp(("parallel", "parallel")),
    )(xp, wq, col_scale, rp)
    return out[:m]


def attention(q, k, v, cos, sin):
    """q/k/v: (B*H, S, Dh) head-major; cos/sin: (S, Dh).  Returns (B*H, S, Dh) bf16."""
    bh, s, dh = q.shape
    scale = 1.0 / math.sqrt(dh)
    tok_spec = pl.BlockSpec((None, s, dh), lambda i: (i, 0, 0))
    cs_spec = pl.BlockSpec((s, dh), lambda i: (0, 0))
    # TODO(synk): flash-style KV-tiled online-softmax for long S (SxS scores must fit VMEM here).
    return pl.pallas_call(
        functools.partial(_attention_kernel, scale=scale),
        out_shape=jax.ShapeDtypeStruct((bh, s, dh), jnp.bfloat16),
        grid=(bh,),
        in_specs=[tok_spec, tok_spec, tok_spec, cs_spec, cs_spec],
        out_specs=tok_spec,
        compiler_params=_cp(("parallel",)),
    )(q, k, v, cos, sin)


# ----------------------------------------------------------------------------
# Plain-JAX glue: rotary tables
# ----------------------------------------------------------------------------
def rotary_cos_sin(s, dh, theta=10000.0):
    inv_freq = 1.0 / (theta ** (jnp.arange(0, dh, 2, dtype=jnp.float32) / dh))
    t = jnp.arange(s, dtype=jnp.float32)
    freqs = jnp.outer(t, inv_freq)                   # (S, Dh/2)
    emb = jnp.concatenate([freqs, freqs], axis=-1)   # (S, Dh)
    return jnp.cos(emb), jnp.sin(emb)


# ----------------------------------------------------------------------------
# Parameter packing: one-time ternary weight quantization (int8) + transpose
# ----------------------------------------------------------------------------
def _quantize_weight(w):
    """PyTorch-layout (N, K) f32 -> ((K, N) ternary int8, scalar f32 scale)."""
    w = w.astype(jnp.float32)
    scale = jnp.mean(jnp.abs(w)) + 1e-8
    wq = jnp.clip(jnp.round(w / scale), -1.0, 1.0)
    return wq.T.astype(jnp.int8), scale


def prepare_params(raw):
    layers = []
    for lp in raw["layers"]:
        wq_q, sq = _quantize_weight(lp["q_proj"])
        wq_k, sk = _quantize_weight(lp["k_proj"])
        wq_v, sv = _quantize_weight(lp["v_proj"])
        D = wq_q.shape[1]
        wq_qkv = jnp.concatenate([wq_q, wq_k, wq_v], axis=1)          # (D, 3D) int8
        s_qkv = jnp.concatenate([jnp.full((1, D), sq, jnp.float32),
                                 jnp.full((1, D), sk, jnp.float32),
                                 jnp.full((1, D), sv, jnp.float32)], axis=1)
        wq_o, so = _quantize_weight(lp["o_proj"])
        wq_g, sg = _quantize_weight(lp["gate_proj"])
        wq_u, su = _quantize_weight(lp["up_proj"])
        wq_d, sd = _quantize_weight(lp["down_proj"])
        I = wq_g.shape[1]
        layers.append({
            "input_layernorm": lp["input_layernorm"],
            "post_attention_layernorm": lp["post_attention_layernorm"],
            "wq_qkv": wq_qkv, "s_qkv": s_qkv,
            "wq_o": wq_o, "s_o": jnp.full((1, D), so, jnp.float32),
            "wq_gate": wq_g, "s_gate": jnp.full((1, I), sg, jnp.float32),
            "wq_up": wq_u, "s_up": jnp.full((1, I), su, jnp.float32),
            "wq_down": wq_d, "s_down": jnp.full((1, D), sd, jnp.float32),
        })
    return {"embed_tokens": raw["embed_tokens"], "layers": layers,
            "norm": raw["norm"]}


# ----------------------------------------------------------------------------
# Model forward
# ----------------------------------------------------------------------------
def layer_forward(x, lp, B, S, H, Dh, cos, sin, eps):
    D = H * Dh
    M = B * S
    # fused RMSNorm + QKV BitLinear (single act quant, one wide N-tiled matmul)
    qkv = norm_bitlinear(x, lp["input_layernorm"], lp["wq_qkv"], lp["s_qkv"], eps)
    qkv = qkv.reshape(B, S, 3, H, Dh)
    # head-major split (one XLA copy per tensor); RoPE is applied inside the kernel.
    q = jnp.transpose(qkv[:, :, 0], (0, 2, 1, 3)).reshape(B * H, S, Dh)
    k = jnp.transpose(qkv[:, :, 1], (0, 2, 1, 3)).reshape(B * H, S, Dh)
    v = jnp.transpose(qkv[:, :, 2], (0, 2, 1, 3)).reshape(B * H, S, Dh)
    attn = attention(q, k, v, cos, sin)                      # (B*H, S, Dh) bf16
    attn = jnp.transpose(attn.reshape(B, H, S, Dh), (0, 2, 1, 3)).reshape(M, D)
    # o_proj BitLinear with fused residual add (residual = layer input x, f32)
    x = bitlinear_residual(attn, lp["wq_o"], lp["s_o"], x)
    # RMSNorm + gate/up BitLinear + SiLU*up (N-tiled over intermediate dim)
    h = norm_gated_mlp(x, lp["post_attention_layernorm"],
                       lp["wq_gate"], lp["s_gate"], lp["wq_up"], lp["s_up"], eps)
    # down-proj BitLinear with fused residual add
    x = bitlinear_residual(h, lp["wq_down"], lp["s_down"], x)
    return x


def bitnet_model_forward(params, input_ids, cfg):
    B, S = input_ids.shape
    D = cfg["hidden_size"]
    H = cfg["num_attention_heads"]
    Dh = D // H
    eps = cfg["rms_norm_eps"]
    # TODO(synk): user attention_mask padding, past_key_values cache, and
    # output_attentions / output_hidden_states plumbing are not implemented
    # (defaults: causal-only mask, no cache).
    embeds = jnp.take(params["embed_tokens"], input_ids, axis=0)      # (B, S, D)
    cos, sin = rotary_cos_sin(S, Dh)
    x = embeds.astype(jnp.float32).reshape(B * S, D)
    for lp in params["layers"]:
        x = layer_forward(x, lp, B, S, H, Dh, cos, sin, eps)
    x = rmsnorm(x, params["norm"], eps)
    return x.reshape(B, S, D)


# ----------------------------------------------------------------------------
# Raw (PyTorch-layout) parameter init
# ----------------------------------------------------------------------------
def init_params(key, cfg):
    D = cfg["hidden_size"]
    I = cfg["intermediate_size"]
    V = cfg["vocab_size"]
    L = cfg["num_hidden_layers"]
    keys = jax.random.split(key, 1 + 7 * L)

    def dense(k, shape):
        return 0.02 * jax.random.normal(k, shape, jnp.float32)

    embed = dense(keys[0], (V, D))
    embed = embed.at[cfg["pad_token_id"]].set(0.0)   # nn.Embedding padding_idx

    layers = []
    ki = 1
    for _ in range(L):
        layers.append({
            "input_layernorm": jnp.ones((D,), jnp.float32),
            "post_attention_layernorm": jnp.ones((D,), jnp.float32),
            "q_proj": dense(keys[ki + 0], (D, D)),
            "k_proj": dense(keys[ki + 1], (D, D)),
            "v_proj": dense(keys[ki + 2], (D, D)),
            "o_proj": dense(keys[ki + 3], (D, D)),
            "gate_proj": dense(keys[ki + 4], (I, D)),
            "up_proj": dense(keys[ki + 5], (I, D)),
            "down_proj": dense(keys[ki + 6], (D, I)),
        })
        ki += 7
    return {"embed_tokens": embed, "layers": layers,
            "norm": jnp.ones((D,), jnp.float32)}


if __name__ == "__main__":
    cfg = dict(
        vocab_size=64,
        hidden_size=32,
        intermediate_size=64,
        num_attention_heads=4,
        num_hidden_layers=2,
        rms_norm_eps=1e-6,
        pad_token_id=0,
    )
    key = jax.random.PRNGKey(0)
    raw_params = init_params(key, cfg)
    params = prepare_params(raw_params)   # one-time ternary (int8) quantization / packing

    batch, seq = 2, 8
    input_ids = jax.random.randint(jax.random.fold_in(key, 123),
                                   (batch, seq), 0, cfg["vocab_size"],
                                   dtype=jnp.int32)

    fwd = jax.jit(lambda p, ids: bitnet_model_forward(p, ids, cfg))
    out = jax.block_until_ready(fwd(params, input_ids))

    assert out.shape == (batch, seq, cfg["hidden_size"]), out.shape
    assert bool(jnp.all(jnp.isfinite(out)))
    print("KERNEL_OK")
</pallas_src>

<mosaic_0001>
module attributes {stable_mosaic.version = 11 : i64} {
  func.func @_norm_bitlinear_kernel(%arg0: i32, %arg1: i32, %arg2: memref<16x32xf32, #tpu.memory_space<vmem>>, %arg3: memref<1x32xf32, #tpu.memory_space<vmem>>, %arg4: memref<32x96xi8, #tpu.memory_space<vmem>>, %arg5: memref<1x96xf32, #tpu.memory_space<vmem>>, %arg6: memref<16x96xbf16, #tpu.memory_space<vmem>>) attributes {dimension_semantics = [#tpu.dimension_semantics<parallel>, #tpu.dimension_semantics<parallel>], iteration_bounds = array<i64: 1, 1>, scalar_prefetch = 0 : i64, scratch_operands = 0 : i64, tpu.core_type = #tpu.core_type<tc>, window_params = [{transform_indices = @transform_0, window_bounds = array<i64: 16, 32>}, {pipeline_mode = #tpu.pipeline_mode<synchronous>, transform_indices = @transform_1, window_bounds = array<i64: 1, 32>}, {transform_indices = @transform_2, window_bounds = array<i64: 32, 96>}, {transform_indices = @transform_3, window_bounds = array<i64: 1, 96>}, {transform_indices = @transform_4, window_bounds = array<i64: 16, 96>}]} {
    %c0 = arith.constant 0 : index
    %c0_0 = arith.constant 0 : index
    %0 = vector.load %arg2[%c0, %c0_0] : memref<16x32xf32, #tpu.memory_space<vmem>>, vector<16x32xf32>
    %c0_1 = arith.constant 0 : index
    %c0_2 = arith.constant 0 : index
    %1 = vector.load %arg3[%c0_1, %c0_2] : memref<1x32xf32, #tpu.memory_space<vmem>>, vector<1x32xf32>
    %2 = arith.mulf %0, %0 : vector<16x32xf32>
    %cst = arith.constant dense<0.000000e+00> : vector<16xf32>
    %3 = vector.multi_reduction <add>, %2, %cst [1] : vector<16x32xf32> to vector<16xf32>
    %4 = vector.shape_cast %3 : vector<16xf32> to vector<16x1xf32>
    %cst_3 = arith.constant 3.200000e+01 : f32
    %5 = vector.broadcast %cst_3 : f32 to vector<16x1xf32>
    %6 = arith.divf %4, %5 : vector<16x1xf32>
    %cst_4 = arith.constant 9.99999997E-7 : f32
    %7 = vector.broadcast %cst_4 : f32 to vector<16x1xf32>
    %8 = arith.addf %6, %7 : vector<16x1xf32>
    %9 = math.rsqrt %8 : vector<16x1xf32>
    %10 = vector.broadcast %9 : vector<16x1xf32> to vector<16x32xf32>
    %11 = arith.mulf %0, %10 : vector<16x32xf32>
    %12 = vector.broadcast %1 : vector<1x32xf32> to vector<16x32xf32>
    %13 = arith.mulf %11, %12 : vector<16x32xf32>
    %14 = math.absf %13 : vector<16x32xf32>
    %cst_5 = arith.constant dense<0xFF800000> : vector<16xf32>
    %15 = vector.multi_reduction <maximumf>, %14, %cst_5 [1] : vector<16x32xf32> to vector<16xf32>
    %16 = vector.shape_cast %15 : vector<16xf32> to vector<16x1xf32>
    %cst_6 = arith.constant 9.99999974E-6 : f32
    %17 = vector.broadcast %cst_6 : f32 to vector<16x1xf32>
    %18 = arith.maximumf %16, %17 : vector<16x1xf32>
    %cst_7 = arith.constant 1.270000e+02 : f32
    %19 = vector.broadcast %cst_7 : f32 to vector<16x1xf32>
    %20 = arith.divf %19, %18 : vector<16x1xf32>
    %21 = vector.broadcast %20 : vector<16x1xf32> to vector<16x32xf32>
    %22 = arith.mulf %13, %21 : vector<16x32xf32>
    %23 = math.roundeven %22 : vector<16x32xf32>
    %cst_8 = arith.constant -1.280000e+02 : f32
    %cst_9 = arith.constant 1.270000e+02 : f32
    %24 = vector.broadcast %cst_8 : f32 to vector<16x32xf32>
    %25 = arith.maximumf %24, %23 : vector<16x32xf32>
    %26 = vector.broadcast %cst_9 : f32 to vector<16x32xf32>
    %27 = arith.minimumf %26, %25 : vector<16x32xf32>
    %28 = arith.truncf %27 : vector<16x32xf32> to vector<16x32xbf16>
    %cst_10 = arith.constant 0.00787401571 : f32
    %29 = vector.broadcast %cst_10 : f32 to vector<16x1xf32>
    %30 = arith.mulf %18, %29 : vector<16x1xf32>
    %c0_11 = arith.constant 0 : index
    %c0_12 = arith.constant 0 : index
    %31 = vector.load %arg4[%c0_11, %c0_12] : memref<32x96xi8, #tpu.memory_space<vmem>>, vector<32x96xi8>
    %32 = arith.sitofp %31 : vector<32x96xi8> to vector<32x96xbf16>
    %cst_13 = arith.constant dense<0.000000e+00> : vector<16x96xf32>
    %33 = tpu.matmul %28, %32, %cst_13 {dimension_numbers = #tpu.dot_dimension_numbers<[1], [0], [0], [1], [0, 0, 1, 1], [], []>} : vector<16x32xbf16>, vector<32x96xbf16>, vector<16x96xf32> -> vector<16x96xf32>
    %c0_14 = arith.constant 0 : index
    %c0_15 = arith.constant 0 : index
    %34 = vector.load %arg5[%c0_14, %c0_15] : memref<1x96xf32, #tpu.memory_space<vmem>>, vector<1x96xf32>
    %35 = vector.broadcast %34 : vector<1x96xf32> to vector<16x96xf32>
    %36 = arith.mulf %33, %35 : vector<16x96xf32>
    %37 = vector.broadcast %30 : vector<16x1xf32> to vector<16x96xf32>
    %38 = arith.mulf %36, %37 : vector<16x96xf32>
    %39 = arith.truncf %38 : vector<16x96xf32> to vector<16x96xbf16>
    %c0_16 = arith.constant 0 : index
    %c0_17 = arith.constant 0 : index
    %40 = vector.load %arg6[%c0_16, %c0_17] : memref<16x96xbf16, #tpu.memory_space<vmem>>, vector<16x96xbf16>
    tpu.vector_store %arg6[%c0_16, %c0_17], %39 {strides = array<i32>} : memref<16x96xbf16, #tpu.memory_space<vmem>>, vector<16x96xbf16>,
    return
  }
  func.func @transform_0(%arg0: i32, %arg1: i32) -> (i32, i32) {
    %c0_i32 = arith.constant 0 : i32
    %c0_i32_0 = arith.constant 0 : i32
    return %arg0, %c0_i32 : i32, i32
  }
  func.func @transform_1(%arg0: i32, %arg1: i32) -> (i32, i32) {
    %c0_i32 = arith.constant 0 : i32
    %c0_i32_0 = arith.constant 0 : i32
    %c0_i32_1 = arith.constant 0 : i32
    return %c0_i32, %c0_i32_0 : i32, i32
  }
  func.func @transform_2(%arg0: i32, %arg1: i32) -> (i32, i32) {
    %c0_i32 = arith.constant 0 : i32
    %c0_i32_0 = arith.constant 0 : i32
    return %c0_i32, %arg1 : i32, i32
  }
  func.func @transform_3(%arg0: i32, %arg1: i32) -> (i32, i32) {
    %c0_i32 = arith.constant 0 : i32
    %c0_i32_0 = arith.constant 0 : i32
    return %c0_i32, %arg1 : i32, i32
  }
  func.func @transform_4(%arg0: i32, %arg1: i32) -> (i32, i32) {
    %c0_i32 = arith.constant 0 : i32
    return %arg0, %arg1 : i32, i32
  }
}

module attributes {stable_mosaic.version = 11 : i64} {
  func.func @_attention_kernel(%arg0: i32, %arg1: memref<1x8x8xbf16, #tpu.memory_space<vmem>>, %arg2: memref<1x8x8xbf16, #tpu.memory_space<vmem>>, %arg3: memref<1x8x8xbf16, #tpu.memory_space<vmem>>, %arg4: memref<8x8xf32, #tpu.memory_space<vmem>>, %arg5: memref<8x8xf32, #tpu.memory_space<vmem>>, %arg6: memref<1x8x8xbf16, #tpu.memory_space<vmem>>) attributes {dimension_semantics = [#tpu.dimension_semantics<parallel>], iteration_bounds = array<i64: 8>, scalar_prefetch = 0 : i64, scratch_operands = 0 : i64, tpu.core_type = #tpu.core_type<tc>, window_params = [{transform_indices = @transform_0, window_bounds = array<i64: 1, 8, 8>}, {transform_indices = @transform_1, window_bounds = array<i64: 1, 8, 8>}, {transform_indices = @transform_2, window_bounds = array<i64: 1, 8, 8>}, {pipeline_mode = #tpu.pipeline_mode<synchronous>, transform_indices = @transform_3, window_bounds = array<i64: 8, 8>}, {pipeline_mode = #tpu.pipeline_mode<synchronous>, transform_indices = @transform_4, window_bounds = array<i64: 8, 8>}, {transform_indices = @transform_5, window_bounds = array<i64: 1, 8, 8>}]} {
    %c0 = arith.constant 0 : index
    %c0_0 = arith.constant 0 : index
    %0 = vector.load %arg4[%c0, %c0_0] : memref<8x8xf32, #tpu.memory_space<vmem>>, vector<8x8xf32>
    %c0_1 = arith.constant 0 : index
    %c0_2 = arith.constant 0 : index
    %1 = vector.load %arg5[%c0_1, %c0_2] : memref<8x8xf32, #tpu.memory_space<vmem>>, vector<8x8xf32>
    %c0_3 = arith.constant 0 : index
    %c0_4 = arith.constant 0 : index
    %c0_5 = arith.constant 0 : index
    %2 = vector.load %arg1[%c0_3, %c0_4, %c0_5] : memref<1x8x8xbf16, #tpu.memory_space<vmem>>, vector<1x8x8xbf16>
    %3 = vector.shape_cast %2 : vector<1x8x8xbf16> to vector<8x8xbf16>
    %4 = arith.extf %3 : vector<8x8xbf16> to vector<8x8xf32>
    %c0_6 = arith.constant 0 : index
    %c0_7 = arith.constant 0 : index
    %c0_8 = arith.constant 0 : index
    %5 = vector.load %arg2[%c0_6, %c0_7, %c0_8] : memref<1x8x8xbf16, #tpu.memory_space<vmem>>, vector<1x8x8xbf16>
    %6 = vector.shape_cast %5 : vector<1x8x8xbf16> to vector<8x8xbf16>
    %7 = arith.extf %6 : vector<8x8xbf16> to vector<8x8xf32>
    %8 = arith.mulf %4, %0 : vector<8x8xf32>
    %9 = vector.extract_strided_slice %4 {offsets = [0, 0], sizes = [8, 4], strides = [1, 1]} : vector<8x8xf32> to vector<8x4xf32>
    %10 = vector.extract_strided_slice %4 {offsets = [0, 4], sizes = [8, 4], strides = [1, 1]} : vector<8x8xf32> to vector<8x4xf32>
    %cst = arith.constant 0.000000e+00 : f32
    %11 = vector.broadcast %cst : f32 to vector<8x4xf32>
    %12 = arith.subf %11, %10 : vector<8x4xf32>
    %13 = tpu.concatenate %12, %9 in 1 : vector<8x4xf32>, vector<8x4xf32> -> vector<8x8xf32>
    %14 = arith.mulf %13, %1 : vector<8x8xf32>
    %15 = arith.addf %8, %14 : vector<8x8xf32>
    %16 = arith.truncf %15 : vector<8x8xf32> to vector<8x8xbf16>
    %17 = arith.mulf %7, %0 : vector<8x8xf32>
    %18 = vector.extract_strided_slice %7 {offsets = [0, 0], sizes = [8, 4], strides = [1, 1]} : vector<8x8xf32> to vector<8x4xf32>
    %19 = vector.extract_strided_slice %7 {offsets = [0, 4], sizes = [8, 4], strides = [1, 1]} : vector<8x8xf32> to vector<8x4xf32>
    %cst_9 = arith.constant 0.000000e+00 : f32
    %20 = vector.broadcast %cst_9 : f32 to vector<8x4xf32>
    %21 = arith.subf %20, %19 : vector<8x4xf32>
    %22 = tpu.concatenate %21, %18 in 1 : vector<8x4xf32>, vector<8x4xf32> -> vector<8x8xf32>
    %23 = arith.mulf %22, %1 : vector<8x8xf32>
    %24 = arith.addf %17, %23 : vector<8x8xf32>
    %25 = arith.truncf %24 : vector<8x8xf32> to vector<8x8xbf16>
    %cst_10 = arith.constant dense<0.000000e+00> : vector<8x8xf32>
    %26 = tpu.matmul %16, %25, %cst_10 {dimension_numbers = #tpu.dot_dimension_numbers<[1], [1], [0], [0], [0, 0, 1, 0], [], []>} : vector<8x8xbf16>, vector<8x8xbf16>, vector<8x8xf32> -> vector<8x8xf32>
    %cst_11 = arith.constant 0.353553385 : f32
    %27 = vector.broadcast %cst_11 : f32 to vector<8x8xf32>
    %28 = arith.mulf %26, %27 : vector<8x8xf32>
    %29 = tpu.iota {dimensions = array<i32: 0>} : vector<8x8xi32>
    %30 = tpu.iota {dimensions = array<i32: 1>} : vector<8x8xi32>
    %31 = arith.cmpi sle, %30, %29 : vector<8x8xi32>
    %cst_12 = arith.constant -1.000000e+30 : f32
    %32 = vector.broadcast %cst_12 : f32 to vector<8x8xf32>
    %33 = arith.select %31, %28, %32 : vector<8x8xi1>, vector<8x8xf32>
    %cst_13 = arith.constant dense<0xFF800000> : vector<8xf32>
    %34 = vector.multi_reduction <maximumf>, %33, %cst_13 [1] : vector<8x8xf32> to vector<8xf32>
    %35 = vector.shape_cast %34 : vector<8xf32> to vector<8x1xf32>
    %36 = vector.broadcast %35 : vector<8x1xf32> to vector<8x8xf32>
    %37 = arith.subf %33, %36 : vector<8x8xf32>
    %38 = math.exp %37 : vector<8x8xf32>
    %cst_14 = arith.constant dense<0.000000e+00> : vector<8xf32>
    %39 = vector.multi_reduction <add>, %38, %cst_14 [1] : vector<8x8xf32> to vector<8xf32>
    %40 = vector.shape_cast %39 : vector<8xf32> to vector<8x1xf32>
    %41 = vector.broadcast %40 : vector<8x1xf32> to vector<8x8xf32>
    %42 = arith.divf %38, %41 : vector<8x8xf32>
    %43 = arith.truncf %42 : vector<8x8xf32> to vector<8x8xbf16>
    %c0_15 = arith.constant 0 : index
    %c0_16 = arith.constant 0 : index
    %c0_17 = arith.constant 0 : index
    %44 = vector.load %arg3[%c0_15, %c0_16, %c0_17] : memref<1x8x8xbf16, #tpu.memory_space<vmem>>, vector<1x8x8xbf16>
    %45 = vector.shape_cast %44 : vector<1x8x8xbf16> to vector<8x8xbf16>
    %cst_18 = arith.constant dense<0.000000e+00> : vector<8x8xf32>
    %46 = tpu.matmul %43, %45, %cst_18 {dimension_numbers = #tpu.dot_dimension_numbers<[1], [0], [0], [1], [0, 0, 1, 1], [], []>} : vector<8x8xbf16>, vector<8x8xbf16>, vector<8x8xf32> -> vector<8x8xf32>
    %47 = arith.truncf %46 : vector<8x8xf32> to vector<8x8xbf16>
    %c0_19 = arith.constant 0 : index
    %c0_20 = arith.constant 0 : index
    %c0_21 = arith.constant 0 : index
    %48 = vector.load %arg6[%c0_19, %c0_20, %c0_21] : memref<1x8x8xbf16, #tpu.memory_space<vmem>>, vector<1x8x8xbf16>
    %49 = vector.shape_cast %48 : vector<1x8x8xbf16> to vector<8x8xbf16>
    %50 = vector.shape_cast %47 : vector<8x8xbf16> to vector<1x8x8xbf16>
    tpu.vector_store %arg6[%c0_19, %c0_20, %c0_21], %50 {strides = array<i32>} : memref<1x8x8xbf16, #tpu.memory_space<vmem>>, vector<1x8x8xbf16>,
    return
  }
  func.func @transform_0(%arg0: i32) -> (i32, i32, i32) {
    %c0_i32 = arith.constant 0 : i32
    %c0_i32_0 = arith.constant 0 : i32
    %c0_i32_1 = arith.constant 0 : i32
    return %arg0, %c0_i32, %c0_i32_0 : i32, i32, i32
  }
  func.func @transform_1(%arg0: i32) -> (i32, i32, i32) {
    %c0_i32 = arith.constant 0 : i32
    %c0_i32_0 = arith.constant 0 : i32
    %c0_i32_1 = arith.constant 0 : i32
    return %arg0, %c0_i32, %c0_i32_0 : i32, i32, i32
  }
  func.func @transform_2(%arg0: i32) -> (i32, i32, i32) {
    %c0_i32 = arith.constant 0 : i32
    %c0_i32_0 = arith.constant 0 : i32
    %c0_i32_1 = arith.constant 0 : i32
    return %arg0, %c0_i32, %c0_i32_0 : i32, i32, i32
  }
  func.func @transform_3(%arg0: i32) -> (i32, i32) {
    %c0_i32 = arith.constant 0 : i32
    %c0_i32_0 = arith.constant 0 : i32
    %c0_i32_1 = arith.constant 0 : i32
    return %c0_i32, %c0_i32_0 : i32, i32
  }
  func.func @transform_4(%arg0: i32) -> (i32, i32) {
    %c0_i32 = arith.constant 0 : i32
    %c0_i32_0 = arith.constant 0 : i32
    %c0_i32_1 = arith.constant 0 : i32
    return %c0_i32, %c0_i32_0 : i32, i32
  }
  func.func @transform_5(%arg0: i32) -> (i32, i32, i32) {
    %c0_i32 = arith.constant 0 : i32
    %c0_i32_0 = arith.constant 0 : i32
    %c0_i32_1 = arith.constant 0 : i32
    return %arg0, %c0_i32, %c0_i32_0 : i32, i32, i32
  }
}

module attributes {stable_mosaic.version = 11 : i64} {
  func.func @_bitlinear_res_kernel(%arg0: i32, %arg1: i32, %arg2: memref<16x32xbf16, #tpu.memory_space<vmem>>, %arg3: memref<32x32xi8, #tpu.memory_space<vmem>>, %arg4: memref<1x32xf32, #tpu.memory_space<vmem>>, %arg5: memref<16x32xf32, #tpu.memory_space<vmem>>, %arg6: memref<16x32xf32, #tpu.memory_space<vmem>>) attributes {dimension_semantics = [#tpu.dimension_semantics<parallel>, #tpu.dimension_semantics<parallel>], iteration_bounds = array<i64: 1, 1>, scalar_prefetch = 0 : i64, scratch_operands = 0 : i64, tpu.core_type = #tpu.core_type<tc>, window_params = [{transform_indices = @transform_0, window_bounds = array<i64: 16, 32>}, {transform_indices = @transform_1, window_bounds = array<i64: 32, 32>}, {transform_indices = @transform_2, window_bounds = array<i64: 1, 32>}, {transform_indices = @transform_3, window_bounds = array<i64: 16, 32>}, {transform_indices = @transform_4, window_bounds = array<i64: 16, 32>}]} {
    %c0 = arith.constant 0 : index
    %c0_0 = arith.constant 0 : index
    %0 = vector.load %arg2[%c0, %c0_0] : memref<16x32xbf16, #tpu.memory_space<vmem>>, vector<16x32xbf16>
    %1 = arith.extf %0 : vector<16x32xbf16> to vector<16x32xf32>
    %2 = math.absf %1 : vector<16x32xf32>
    %cst = arith.constant dense<0xFF800000> : vector<16xf32>
    %3 = vector.multi_reduction <maximumf>, %2, %cst [1] : vector<16x32xf32> to vector<16xf32>
    %4 = vector.shape_cast %3 : vector<16xf32> to vector<16x1xf32>
    %cst_1 = arith.constant 9.99999974E-6 : f32
    %5 = vector.broadcast %cst_1 : f32 to vector<16x1xf32>
    %6 = arith.maximumf %4, %5 : vector<16x1xf32>
    %cst_2 = arith.constant 1.270000e+02 : f32
    %7 = vector.broadcast %cst_2 : f32 to vector<16x1xf32>
    %8 = arith.divf %7, %6 : vector<16x1xf32>
    %9 = vector.broadcast %8 : vector<16x1xf32> to vector<16x32xf32>
    %10 = arith.mulf %1, %9 : vector<16x32xf32>
    %11 = math.roundeven %10 : vector<16x32xf32>
    %cst_3 = arith.constant -1.280000e+02 : f32
    %cst_4 = arith.constant 1.270000e+02 : f32
    %12 = vector.broadcast %cst_3 : f32 to vector<16x32xf32>
    %13 = arith.maximumf %12, %11 : vector<16x32xf32>
    %14 = vector.broadcast %cst_4 : f32 to vector<16x32xf32>
    %15 = arith.minimumf %14, %13 : vector<16x32xf32>
    %16 = arith.truncf %15 : vector<16x32xf32> to vector<16x32xbf16>
    %cst_5 = arith.constant 0.00787401571 : f32
    %17 = vector.broadcast %cst_5 : f32 to vector<16x1xf32>
    %18 = arith.mulf %6, %17 : vector<16x1xf32>
    %c0_6 = arith.constant 0 : index
    %c0_7 = arith.constant 0 : index
    %19 = vector.load %arg3[%c0_6, %c0_7] : memref<32x32xi8, #tpu.memory_space<vmem>>, vector<32x32xi8>
    %20 = arith.sitofp %19 : vector<32x32xi8> to vector<32x32xbf16>
    %cst_8 = arith.constant dense<0.000000e+00> : vector<16x32xf32>
    %21 = tpu.matmul %16, %20, %cst_8 {dimension_numbers = #tpu.dot_dimension_numbers<[1], [0], [0], [1], [0, 0, 1, 1], [], []>} : vector<16x32xbf16>, vector<32x32xbf16>, vector<16x32xf32> -> vector<16x32xf32>
    %c0_9 = arith.constant 0 : index
    %c0_10 = arith.constant 0 : index
    %22 = vector.load %arg5[%c0_9, %c0_10] : memref<16x32xf32, #tpu.memory_space<vmem>>, vector<16x32xf32>
    %c0_11 = arith.constant 0 : index
    %c0_12 = arith.constant 0 : index
    %23 = vector.load %arg4[%c0_11, %c0_12] : memref<1x32xf32, #tpu.memory_space<vmem>>, vector<1x32xf32>
    %24 = vector.broadcast %23 : vector<1x32xf32> to vector<16x32xf32>
    %25 = arith.mulf %21, %24 : vector<16x32xf32>
    %26 = vector.broadcast %18 : vector<16x1xf32> to vector<16x32xf32>
    %27 = arith.mulf %25, %26 : vector<16x32xf32>
    %28 = arith.addf %22, %27 : vector<16x32xf32>
    %c0_13 = arith.constant 0 : index
    %c0_14 = arith.constant 0 : index
    %29 = vector.load %arg6[%c0_13, %c0_14] : memref<16x32xf32, #tpu.memory_space<vmem>>, vector<16x32xf32>
    tpu.vector_store %arg6[%c0_13, %c0_14], %28 {strides = array<i32>} : memref<16x32xf32, #tpu.memory_space<vmem>>, vector<16x32xf32>,
    return
  }
  func.func @transform_0(%arg0: i32, %arg1: i32) -> (i32, i32) {
    %c0_i32 = arith.constant 0 : i32
    %c0_i32_0 = arith.constant 0 : i32
    return %arg0, %c0_i32 : i32, i32
  }
  func.func @transform_1(%arg0: i32, %arg1: i32) -> (i32, i32) {
    %c0_i32 = arith.constant 0 : i32
    %c0_i32_0 = arith.constant 0 : i32
    return %c0_i32, %arg1 : i32, i32
  }
  func.func @transform_2(%arg0: i32, %arg1: i32) -> (i32, i32) {
    %c0_i32 = arith.constant 0 : i32
    %c0_i32_0 = arith.constant 0 : i32
    return %c0_i32, %arg1 : i32, i32
  }
  func.func @transform_3(%arg0: i32, %arg1: i32) -> (i32, i32) {
    %c0_i32 = arith.constant 0 : i32
    return %arg0, %arg1 : i32, i32
  }
  func.func @transform_4(%arg0: i32, %arg1: i32) -> (i32, i32) {
    %c0_i32 = arith.constant 0 : i32
    return %arg0, %arg1 : i32, i32
  }
}

module attributes {stable_mosaic.version = 11 : i64} {
  func.func @_norm_gated_mlp_kernel(%arg0: i32, %arg1: i32, %arg2: memref<16x32xf32, #tpu.memory_space<vmem>>, %arg3: memref<1x32xf32, #tpu.memory_space<vmem>>, %arg4: memref<32x64xi8, #tpu.memory_space<vmem>>, %arg5: memref<1x64xf32, #tpu.memory_space<vmem>>, %arg6: memref<32x64xi8, #tpu.memory_space<vmem>>, %arg7: memref<1x64xf32, #tpu.memory_space<vmem>>, %arg8: memref<16x64xbf16, #tpu.memory_space<vmem>>) attributes {dimension_semantics = [#tpu.dimension_semantics<parallel>, #tpu.dimension_semantics<parallel>], iteration_bounds = array<i64: 1, 1>, scalar_prefetch = 0 : i64, scratch_operands = 0 : i64, tpu.core_type = #tpu.core_type<tc>, window_params = [{transform_indices = @transform_0, window_bounds = array<i64: 16, 32>}, {pipeline_mode = #tpu.pipeline_mode<synchronous>, transform_indices = @transform_1, window_bounds = array<i64: 1, 32>}, {transform_indices = @transform_2, window_bounds = array<i64: 32, 64>}, {transform_indices = @transform_3, window_bounds = array<i64: 1, 64>}, {transform_indices = @transform_4, window_bounds = array<i64: 32, 64>}, {transform_indices = @transform_5, window_bounds = array<i64: 1, 64>}, {transform_indices = @transform_6, window_bounds = array<i64: 16, 64>}]} {
    %c0 = arith.constant 0 : index
    %c0_0 = arith.constant 0 : index
    %0 = vector.load %arg2[%c0, %c0_0] : memref<16x32xf32, #tpu.memory_space<vmem>>, vector<16x32xf32>
    %c0_1 = arith.constant 0 : index
    %c0_2 = arith.constant 0 : index
    %1 = vector.load %arg3[%c0_1, %c0_2] : memref<1x32xf32, #tpu.memory_space<vmem>>, vector<1x32xf32>
    %2 = arith.mulf %0, %0 : vector<16x32xf32>
    %cst = arith.constant dense<0.000000e+00> : vector<16xf32>
    %3 = vector.multi_reduction <add>, %2, %cst [1] : vector<16x32xf32> to vector<16xf32>
    %4 = vector.shape_cast %3 : vector<16xf32> to vector<16x1xf32>
    %cst_3 = arith.constant 3.200000e+01 : f32
    %5 = vector.broadcast %cst_3 : f32 to vector<16x1xf32>
    %6 = arith.divf %4, %5 : vector<16x1xf32>
    %cst_4 = arith.constant 9.99999997E-7 : f32
    %7 = vector.broadcast %cst_4 : f32 to vector<16x1xf32>
    %8 = arith.addf %6, %7 : vector<16x1xf32>
    %9 = math.rsqrt %8 : vector<16x1xf32>
    %10 = vector.broadcast %9 : vector<16x1xf32> to vector<16x32xf32>
    %11 = arith.mulf %0, %10 : vector<16x32xf32>
    %12 = vector.broadcast %1 : vector<1x32xf32> to vector<16x32xf32>
    %13 = arith.mulf %11, %12 : vector<16x32xf32>
    %14 = math.absf %13 : vector<16x32xf32>
    %cst_5 = arith.constant dense<0xFF800000> : vector<16xf32>
    %15 = vector.multi_reduction <maximumf>, %14, %cst_5 [1] : vector<16x32xf32> to vector<16xf32>
    %16 = vector.shape_cast %15 : vector<16xf32> to vector<16x1xf32>
    %cst_6 = arith.constant 9.99999974E-6 : f32
    %17 = vector.broadcast %cst_6 : f32 to vector<16x1xf32>
    %18 = arith.maximumf %16, %17 : vector<16x1xf32>
    %cst_7 = arith.constant 1.270000e+02 : f32
    %19 = vector.broadcast %cst_7 : f32 to vector<16x1xf32>
    %20 = arith.divf %19, %18 : vector<16x1xf32>
    %21 = vector.broadcast %20 : vector<16x1xf32> to vector<16x32xf32>
    %22 = arith.mulf %13, %21 : vector<16x32xf32>
    %23 = math.roundeven %22 : vector<16x32xf32>
    %cst_8 = arith.constant -1.280000e+02 : f32
    %cst_9 = arith.constant 1.270000e+02 : f32
    %24 = vector.broadcast %cst_8 : f32 to vector<16x32xf32>
    %25 = arith.maximumf %24, %23 : vector<16x32xf32>
    %26 = vector.broadcast %cst_9 : f32 to vector<16x32xf32>
    %27 = arith.minimumf %26, %25 : vector<16x32xf32>
    %28 = arith.truncf %27 : vector<16x32xf32> to vector<16x32xbf16>
    %cst_10 = arith.constant 0.00787401571 : f32
    %29 = vector.broadcast %cst_10 : f32 to vector<16x1xf32>
    %30 = arith.mulf %18, %29 : vector<16x1xf32>
    %c0_11 = arith.constant 0 : index
    %c0_12 = arith.constant 0 : index
    %31 = vector.load %arg4[%c0_11, %c0_12] : memref<32x64xi8, #tpu.memory_space<vmem>>, vector<32x64xi8>
    %32 = arith.sitofp %31 : vector<32x64xi8> to vector<32x64xbf16>
    %cst_13 = arith.constant dense<0.000000e+00> : vector<16x64xf32>
    %33 = tpu.matmul %28, %32, %cst_13 {dimension_numbers = #tpu.dot_dimension_numbers<[1], [0], [0], [1], [0, 0, 1, 1], [], []>} : vector<16x32xbf16>, vector<32x64xbf16>, vector<16x64xf32> -> vector<16x64xf32>
    %c0_14 = arith.constant 0 : index
    %c0_15 = arith.constant 0 : index
    %34 = vector.load %arg5[%c0_14, %c0_15] : memref<1x64xf32, #tpu.memory_space<vmem>>, vector<1x64xf32>
    %35 = vector.broadcast %34 : vector<1x64xf32> to vector<16x64xf32>
    %36 = vector.broadcast %30 : vector<16x1xf32> to vector<16x64xf32>
    %37 = arith.mulf %35, %36 : vector<16x64xf32>
    %38 = arith.mulf %33, %37 : vector<16x64xf32>
    %c0_16 = arith.constant 0 : index
    %c0_17 = arith.constant 0 : index
    %39 = vector.load %arg6[%c0_16, %c0_17] : memref<32x64xi8, #tpu.memory_space<vmem>>, vector<32x64xi8>
    %40 = arith.sitofp %39 : vector<32x64xi8> to vector<32x64xbf16>
    %cst_18 = arith.constant dense<0.000000e+00> : vector<16x64xf32>
    %41 = tpu.matmul %28, %40, %cst_18 {dimension_numbers = #tpu.dot_dimension_numbers<[1], [0], [0], [1], [0, 0, 1, 1], [], []>} : vector<16x32xbf16>, vector<32x64xbf16>, vector<16x64xf32> -> vector<16x64xf32>
    %c0_19 = arith.constant 0 : index
    %c0_20 = arith.constant 0 : index
    %42 = vector.load %arg7[%c0_19, %c0_20] : memref<1x64xf32, #tpu.memory_space<vmem>>, vector<1x64xf32>
    %43 = vector.broadcast %42 : vector<1x64xf32> to vector<16x64xf32>
    %44 = vector.broadcast %30 : vector<16x1xf32> to vector<16x64xf32>
    %45 = arith.mulf %43, %44 : vector<16x64xf32>
    %46 = arith.mulf %41, %45 : vector<16x64xf32>
    %47 = arith.negf %38 : vector<16x64xf32>
    %48 = math.exp %47 : vector<16x64xf32>
    %cst_21 = arith.constant 1.000000e+00 : f32
    %49 = vector.broadcast %cst_21 : f32 to vector<16x64xf32>
    %50 = arith.addf %49, %48 : vector<16x64xf32>
    %51 = arith.divf %49, %50 : vector<16x64xf32>
    %52 = arith.mulf %38, %51 : vector<16x64xf32>
    %53 = arith.mulf %52, %46 : vector<16x64xf32>
    %54 = arith.truncf %53 : vector<16x64xf32> to vector<16x64xbf16>
    %c0_22 = arith.constant 0 : index
    %c0_23 = arith.constant 0 : index
    %55 = vector.load %arg8[%c0_22, %c0_23] : memref<16x64xbf16, #tpu.memory_space<vmem>>, vector<16x64xbf16>
    tpu.vector_store %arg8[%c0_22, %c0_23], %54 {strides = array<i32>} : memref<16x64xbf16, #tpu.memory_space<vmem>>, vector<16x64xbf16>,
    return
  }
  func.func @transform_0(%arg0: i32, %arg1: i32) -> (i32, i32) {
    %c0_i32 = arith.constant 0 : i32
    %c0_i32_0 = arith.constant 0 : i32
    return %arg0, %c0_i32 : i32, i32
  }
  func.func @transform_1(%arg0: i32, %arg1: i32) -> (i32, i32) {
    %c0_i32 = arith.constant 0 : i32
    %c0_i32_0 = arith.constant 0 : i32
    %c0_i32_1 = arith.constant 0 : i32
    return %c0_i32, %c0_i32_0 : i32, i32
  }
  func.func @transform_2(%arg0: i32, %arg1: i32) -> (i32, i32) {
    %c0_i32 = arith.constant 0 : i32
    %c0_i32_0 = arith.constant 0 : i32
    return %c0_i32, %arg1 : i32, i32
  }
  func.func @transform_3(%arg0: i32, %arg1: i32) -> (i32, i32) {
    %c0_i32 = arith.constant 0 : i32
    %c0_i32_0 = arith.constant 0 : i32
    return %c0_i32, %arg1 : i32, i32
  }
  func.func @transform_4(%arg0: i32, %arg1: i32) -> (i32, i32) {
    %c0_i32 = arith.constant 0 : i32
    %c0_i32_0 = arith.constant 0 : i32
    return %c0_i32, %arg1 : i32, i32
  }
  func.func @transform_5(%arg0: i32, %arg1: i32) -> (i32, i32) {
    %c0_i32 = arith.constant 0 : i32
    %c0_i32_0 = arith.constant 0 : i32
    return %c0_i32, %arg1 : i32, i32
  }
  func.func @transform_6(%arg0: i32, %arg1: i32) -> (i32, i32) {
    %c0_i32 = arith.constant 0 : i32
    return %arg0, %arg1 : i32, i32
  }
}

module attributes {stable_mosaic.version = 11 : i64} {
  func.func @_bitlinear_res_kernel(%arg0: i32, %arg1: i32, %arg2: memref<16x64xbf16, #tpu.memory_space<vmem>>, %arg3: memref<64x32xi8, #tpu.memory_space<vmem>>, %arg4: memref<1x32xf32, #tpu.memory_space<vmem>>, %arg5: memref<16x32xf32, #tpu.memory_space<vmem>>, %arg6: memref<16x32xf32, #tpu.memory_space<vmem>>) attributes {dimension_semantics = [#tpu.dimension_semantics<parallel>, #tpu.dimension_semantics<parallel>], iteration_bounds = array<i64: 1, 1>, scalar_prefetch = 0 : i64, scratch_operands = 0 : i64, tpu.core_type = #tpu.core_type<tc>, window_params = [{transform_indices = @transform_0, window_bounds = array<i64: 16, 64>}, {transform_indices = @transform_1, window_bounds = array<i64: 64, 32>}, {transform_indices = @transform_2, window_bounds = array<i64: 1, 32>}, {transform_indices = @transform_3, window_bounds = array<i64: 16, 32>}, {transform_indices = @transform_4, window_bounds = array<i64: 16, 32>}]} {
    %c0 = arith.constant 0 : index
    %c0_0 = arith.constant 0 : index
    %0 = vector.load %arg2[%c0, %c0_0] : memref<16x64xbf16, #tpu.memory_space<vmem>>, vector<16x64xbf16>
    %1 = arith.extf %0 : vector<16x64xbf16> to vector<16x64xf32>
    %2 = math.absf %1 : vector<16x64xf32>
    %cst = arith.constant dense<0xFF800000> : vector<16xf32>
    %3 = vector.multi_reduction <maximumf>, %2, %cst [1] : vector<16x64xf32> to vector<16xf32>
    %4 = vector.shape_cast %3 : vector<16xf32> to vector<16x1xf32>
    %cst_1 = arith.constant 9.99999974E-6 : f32
    %5 = vector.broadcast %cst_1 : f32 to vector<16x1xf32>
    %6 = arith.maximumf %4, %5 : vector<16x1xf32>
    %cst_2 = arith.constant 1.270000e+02 : f32
    %7 = vector.broadcast %cst_2 : f32 to vector<16x1xf32>
    %8 = arith.divf %7, %6 : vector<16x1xf32>
    %9 = vector.broadcast %8 : vector<16x1xf32> to vector<16x64xf32>
    %10 = arith.mulf %1, %9 : vector<16x64xf32>
    %11 = math.roundeven %10 : vector<16x64xf32>
    %cst_3 = arith.constant -1.280000e+02 : f32
    %cst_4 = arith.constant 1.270000e+02 : f32
    %12 = vector.broadcast %cst_3 : f32 to vector<16x64xf32>
    %13 = arith.maximumf %12, %11 : vector<16x64xf32>
    %14 = vector.broadcast %cst_4 : f32 to vector<16x64xf32>
    %15 = arith.minimumf %14, %13 : vector<16x64xf32>
    %16 = arith.truncf %15 : vector<16x64xf32> to vector<16x64xbf16>
    %cst_5 = arith.constant 0.00787401571 : f32
    %17 = vector.broadcast %cst_5 : f32 to vector<16x1xf32>
    %18 = arith.mulf %6, %17 : vector<16x1xf32>
    %c0_6 = arith.constant 0 : index
    %c0_7 = arith.constant 0 : index
    %19 = vector.load %arg3[%c0_6, %c0_7] : memref<64x32xi8, #tpu.memory_space<vmem>>, vector<64x32xi8>
    %20 = arith.sitofp %19 : vector<64x32xi8> to vector<64x32xbf16>
    %cst_8 = arith.constant dense<0.000000e+00> : vector<16x32xf32>
    %21 = tpu.matmul %16, %20, %cst_8 {dimension_numbers = #tpu.dot_dimension_numbers<[1], [0], [0], [1], [0, 0, 1, 1], [], []>} : vector<16x64xbf16>, vector<64x32xbf16>, vector<16x32xf32> -> vector<16x32xf32>
    %c0_9 = arith.constant 0 : index
    %c0_10 = arith.constant 0 : index
    %22 = vector.load %arg5[%c0_9, %c0_10] : memref<16x32xf32, #tpu.memory_space<vmem>>, vector<16x32xf32>
    %c0_11 = arith.constant 0 : index
    %c0_12 = arith.constant 0 : index
    %23 = vector.load %arg4[%c0_11, %c0_12] : memref<1x32xf32, #tpu.memory_space<vmem>>, vector<1x32xf32>
    %24 = vector.broadcast %23 : vector<1x32xf32> to vector<16x32xf32>
    %25 = arith.mulf %21, %24 : vector<16x32xf32>
    %26 = vector.broadcast %18 : vector<16x1xf32> to vector<16x32xf32>
    %27 = arith.mulf %25, %26 : vector<16x32xf32>
    %28 = arith.addf %22, %27 : vector<16x32xf32>
    %c0_13 = arith.constant 0 : index
    %c0_14 = arith.constant 0 : index
    %29 = vector.load %arg6[%c0_13, %c0_14] : memref<16x32xf32, #tpu.memory_space<vmem>>, vector<16x32xf32>
    tpu.vector_store %arg6[%c0_13, %c0_14], %28 {strides = array<i32>} : memref<16x32xf32, #tpu.memory_space<vmem>>, vector<16x32xf32>,
    return
  }
  func.func @transform_0(%arg0: i32, %arg1: i32) -> (i32, i32) {
    %c0_i32 = arith.constant 0 : i32
    %c0_i32_0 = arith.constant 0 : i32
    return %arg0, %c0_i32 : i32, i32
  }
  func.func @transform_1(%arg0: i32, %arg1: i32) -> (i32, i32) {
    %c0_i32 = arith.constant 0 : i32
    %c0_i32_0 = arith.constant 0 : i32
    return %c0_i32, %arg1 : i32, i32
  }
  func.func @transform_2(%arg0: i32, %arg1: i32) -> (i32, i32) {
    %c0_i32 = arith.constant 0 : i32
    %c0_i32_0 = arith.constant 0 : i32
    return %c0_i32, %arg1 : i32, i32
  }
  func.func @transform_3(%arg0: i32, %arg1: i32) -> (i32, i32) {
    %c0_i32 = arith.constant 0 : i32
    return %arg0, %arg1 : i32, i32
  }
  func.func @transform_4(%arg0: i32, %arg1: i32) -> (i32, i32) {
    %c0_i32 = arith.constant 0 : i32
    return %arg0, %arg1 : i32, i32
  }
}

module attributes {stable_mosaic.version = 11 : i64} {
  func.func @_rmsnorm_kernel(%arg0: i32, %arg1: memref<16x32xf32, #tpu.memory_space<vmem>>, %arg2: memref<1x32xf32, #tpu.memory_space<vmem>>, %arg3: memref<16x32xf32, #tpu.memory_space<vmem>>) attributes {dimension_semantics = [#tpu.dimension_semantics<parallel>], iteration_bounds = array<i64: 1>, scalar_prefetch = 0 : i64, scratch_operands = 0 : i64, tpu.core_type = #tpu.core_type<tc>, window_params = [{transform_indices = @transform_0, window_bounds = array<i64: 16, 32>}, {pipeline_mode = #tpu.pipeline_mode<synchronous>, transform_indices = @transform_1, window_bounds = array<i64: 1, 32>}, {transform_indices = @transform_2, window_bounds = array<i64: 16, 32>}]} {
    %c0 = arith.constant 0 : index
    %c0_0 = arith.constant 0 : index
    %0 = vector.load %arg1[%c0, %c0_0] : memref<16x32xf32, #tpu.memory_space<vmem>>, vector<16x32xf32>
    %c0_1 = arith.constant 0 : index
    %c0_2 = arith.constant 0 : index
    %1 = vector.load %arg2[%c0_1, %c0_2] : memref<1x32xf32, #tpu.memory_space<vmem>>, vector<1x32xf32>
    %2 = arith.mulf %0, %0 : vector<16x32xf32>
    %cst = arith.constant dense<0.000000e+00> : vector<16xf32>
    %3 = vector.multi_reduction <add>, %2, %cst [1] : vector<16x32xf32> to vector<16xf32>
    %4 = vector.shape_cast %3 : vector<16xf32> to vector<16x1xf32>
    %cst_3 = arith.constant 3.200000e+01 : f32
    %5 = vector.broadcast %cst_3 : f32 to vector<16x1xf32>
    %6 = arith.divf %4, %5 : vector<16x1xf32>
    %cst_4 = arith.constant 9.99999997E-7 : f32
    %7 = vector.broadcast %cst_4 : f32 to vector<16x1xf32>
    %8 = arith.addf %6, %7 : vector<16x1xf32>
    %9 = math.rsqrt %8 : vector<16x1xf32>
    %10 = vector.broadcast %9 : vector<16x1xf32> to vector<16x32xf32>
    %11 = arith.mulf %0, %10 : vector<16x32xf32>
    %12 = vector.broadcast %1 : vector<1x32xf32> to vector<16x32xf32>
    %13 = arith.mulf %11, %12 : vector<16x32xf32>
    %c0_5 = arith.constant 0 : index
    %c0_6 = arith.constant 0 : index
    %14 = vector.load %arg3[%c0_5, %c0_6] : memref<16x32xf32, #tpu.memory_space<vmem>>, vector<16x32xf32>
    tpu.vector_store %arg3[%c0_5, %c0_6], %13 {strides = array<i32>} : memref<16x32xf32, #tpu.memory_space<vmem>>, vector<16x32xf32>,
    return
  }
  func.func @transform_0(%arg0: i32) -> (i32, i32) {
    %c0_i32 = arith.constant 0 : i32
    %c0_i32_0 = arith.constant 0 : i32
    return %arg0, %c0_i32 : i32, i32
  }
  func.func @transform_1(%arg0: i32) -> (i32, i32) {
    %c0_i32 = arith.constant 0 : i32
    %c0_i32_0 = arith.constant 0 : i32
    %c0_i32_1 = arith.constant 0 : i32
    return %c0_i32, %c0_i32_0 : i32, i32
  }
  func.func @transform_2(%arg0: i32) -> (i32, i32) {
    %c0_i32 = arith.constant 0 : i32
    %c0_i32_0 = arith.constant 0 : i32
    return %arg0, %c0_i32 : i32, i32
  }
}

</mosaic_0001>

<llo_original>
// kernel: _lambda_.11
$region0: #{_lambda_.11}
  #allocation0 [shape = 'u32[]', space=smem, size = 0x4, offset = 0x4, fixed_abs, tag = 'smem constant byte address 0x4 - core index']
  #allocation1 [shape = 'u32[144,128]{1,0:T(1,128)}', space=vmem, size = 0x12000, scoped, tag = 'internal scratch']
  %s0 = inlined_call_operand.vmem [shape: f32[16,32], index: 0, kind: input, shape index: {}]
  %s1 = inlined_call_operand.vmem [shape: f32[1,32], index: 1, kind: input, shape index: {}]
  %s2 = inlined_call_operand.vmem [shape: s8[32,96], index: 2, kind: input, shape index: {}]
  %s3 = inlined_call_operand.vmem [shape: f32[1,96], index: 3, kind: input, shape index: {}]
  %s4 = inlined_call_operand.vmem [shape: bf16[16,96], index: 4, kind: output, shape index: {}]
  %s5 = sld [smem:[#allocation0]]
  $region26: #{_lambda_.11} parent=0
    _
  %s7 = ssub.s32 1, %s5
  %s8 = scalar_select 0, %s7, %s5
  // Predicated region
  $region2: #{_lambda_.11} parent=0 // pred_check
    _
  $region3: #{_lambda_.11} parent=0 // pred_check_branch
    %10 = sbr.rel (0) target = $region5
  $region4: #{_lambda_.11} parent=0 // pred_region
    _
  $region5: #{_lambda_.11} parent=0 // pred_fallthru
    _
  // Predicated region
  $region6: #{_lambda_.11} parent=0 // pred_check
    _
  $region7: #{_lambda_.11} parent=0 // pred_check_branch
    %12 = sbr.rel (0) target = $region9
  $region8: #{_lambda_.11} parent=0 // pred_region
    _
  $region9: #{_lambda_.11} parent=0 // pred_fallthru
    _
  // Predicated region
  $region10: #{_lambda_.11} parent=0 // pred_check
    _
  $region11: #{_lambda_.11} parent=0 // pred_check_branch
    %14 = sbr.rel (0) target = $region13
  $region12: #{_lambda_.11} parent=0 // pred_region
    _
  $region13: #{_lambda_.11} parent=0 // pred_fallthru
    _
  // Predicated region
  $region14: #{_lambda_.11} parent=0 // pred_check
    _
  $region15: #{_lambda_.11} parent=0 // pred_check_branch
    %16 = sbr.rel (0) target = $region17
  $region16: #{_lambda_.11} parent=0 // pred_region
    _
  $region17: #{_lambda_.11} parent=0 // pred_fallthru
    _
  %v18 = vld [vmem:[%s0] sm:$0xff]
  %v19 = vld [vmem:[%s0 + $0x8] sm:$0xff]
  %v20 = vld [vmem:[%s1] sm:$0x1]
  %v21 = vmul.f32 %v18, %v18
  %v22 = vmul.f32 %v19, %v19
  %vm23 = vcmask 261120
  %v24 = vsel %vm23, %v21, 0.0
  %25 = vadd.xlane.f32.xlu0 %v24
  %v26 = vpop.xlane.xlu0 %25
  %v27 = vsel %vm23, %v22, 0.0
  %28 = vadd.xlane.f32.xlu0 %v27
  %v29 = vpop.xlane.xlu0 %28
  %v30 = vrcp.pop 32.0
  %v31 = vmul.f32 %v26, %v30
  %v32 = vmul.f32 %v29, %v30
  %v33 = vadd.f32 %v31, 1e-06
  %v34 = vadd.f32 %v32, 1e-06
  %v35 = vrsqrt.pop %v33
  %v36 = vrsqrt.pop %v34
  %v37 = vmul.f32 %v18, %v35
  %v38 = vmul.f32 %v19, %v36
  %v40 = vlaneseq
  %v41 = vshrl.u32 %v40, 7
  %v42 = vsub.s32 0, %v41
  %v43 = vrot.slane %v20, %v42
  %v45 = vmul.f32 %v37, %v43
  %v46 = vmul.f32 %v38, %v43
  %v47 = vand.u32 2147483647, %v45
  %v48 = vand.u32 2147483647, %v46
  %v49 = vsel %vm23, %v47, -inf
  %50 = vmax.xlane.f32.xlu0 %v49
  %v51 = vpop.xlane.xlu0 %50
  %v52 = vsel %vm23, %v48, -inf
  %53 = vmax.xlane.f32.xlu0 %v52
  %v54 = vpop.xlane.xlu0 %53
  %v55 = vmax.f32 %v51, 1e-05
  %v56 = vmax.f32 %v54, 1e-05
  %v57 = vrcp.pop %v55
  %v58 = vmul.f32 127.0, %v57
  %v59 = vrcp.pop %v56
  %v60 = vmul.f32 127.0, %v59
  %v61 = vmul.f32 %v45, %v58
  %v62 = vmul.f32 %v46, %v60
  %v63 = vround.ne.pseudo %v61
  %v64 = vround.ne.pseudo %v62
  %v65 = vmax.f32 %v63, -128.0
  %v66 = vmax.f32 %v64, -128.0
  %v67 = vmin.f32 %v65, 127.0
  %v68 = vmin.f32 %v66, 127.0
  %v69 = vpack.c.bf16 %v68, %v67
  %v70 = vmul.f32 %v55, 0.007874016
  %v71 = vmul.f32 %v56, 0.007874016
  %v72 = vld [vmem:[%s2] sm:$0xff]
  %v73 = vunpack.c.l.s8.bf16 %v72
  %v74 = vunpack.c.h.s8.bf16 %v72
  %v76 = vsel %vm23, %v69, 0
  %78 = vmatprep.subr.bf16.mxu0 0
  %79 = vmatpush1.bf16.msra.mxu0 %v73
  %80 = vmatprep.subr.bf16.mxu0 0
  %81 = vmatpush1.bf16.msra.mxu0 %v74
  %82 = vmatprep.subr.bf16.mxu0 0
  %83 = vmatpush1.bf16.msra.mxu0 0
  %84 = vmatprep.subr.bf16.mxu0 0
  %85 = vmatpush1.bf16.msra.mxu0 0
  %86 = vmatprep.subr.bf16.mxu0 0
  %87 = vmatpush1.bf16.msra.mxu0 0
  %88 = vmatprep.subr.bf16.mxu0 0
  %89 = vmatpush1.bf16.msra.mxu0 0
  %90 = vmatprep.subr.bf16.mxu0 0
  %91 = vmatpush1.bf16.msra.mxu0 0
  %92 = vmatprep.subr.bf16.mxu0 0
  %93 = vmatpush1.bf16.msra.mxu0 0
  %94 = vmatprep.subr.bf16.mxu0 0
  %95 = vmatpush1.bf16.msra.mxu0 0
  %96 = vmatprep.subr.bf16.mxu0 0
  %97 = vmatpush1.bf16.msra.mxu0 0
  %98 = vmatprep.subr.bf16.mxu0 0
  %99 = vmatpush1.bf16.msra.mxu0 0
  %100 = vmatprep.subr.bf16.mxu0 0
  %101 = vmatpush1.bf16.msra.mxu0 0
  %102 = vmatprep.subr.bf16.mxu0 0
  %103 = vmatpush1.bf16.msra.mxu0 0
  %104 = vmatprep.subr.bf16.mxu0 0
  %105 = vmatpush1.bf16.msra.mxu0 0
  %106 = vmatprep.subr.bf16.mxu0 0
  %107 = vmatpush1.bf16.msra.mxu0 0
  %108 = vmatprep.subr.bf16.mxu0 0
  %109 = vmatpush1.bf16.msra.mxu0 0
  %110 = vmatprep.mubr.bf16.mxu0 0
  %111 = vmatmul.mubr.bf16.gmra.mrb[0].mxu0 %v76
  %v112 = vpop.f32.mrb[0].mxu0
  %v113 = vadd.f32 0.0, %v112
  %v114 = vpop.f32.mrb[0].mxu0
  %v115 = vpop.f32.mrb[0].mxu0
  %v116 = vadd.f32 0.0, %v115
  %v117 = vpop.f32.mrb[0].mxu0
  %118 = vdwg.mxu0
  %v119 = vld [vmem:[%s3] sm:$0x1]
  %v121 = vlaneseq
  %v122 = vshrl.u32 %v121, 7
  %v123 = vsub.s32 0, %v122
  %v124 = vrot.slane %v119, %v123
  %v126 = vmul.f32 %v113, %v124
  %v127 = vmul.f32 %v116, %v124
  %v128 = vmul.f32 %v126, %v70
  %v129 = vmul.f32 %v127, %v71
  %v130 = vpack.c.bf16 %v129, %v128
  %v132 = vunpack.c.l.b16 %v130
  %v133 = vunpack.c.h.b16 %v130
  %v134 = vpack.c.b16 %v132, %v132
  %v135 = vpack.c.b16 %v133, %v133
  %vm138 = vcmask 781312
  %139 = vst.msk [vmem:[%s4] sm:$0xf] %vm138, %v134
  %140 = vst.msk [vmem:[%s4 + $0x4] sm:$0xf] %vm138, %v135
  // Predicated region
  $region18: #{_lambda_.11} parent=0 // pred_check
    _
  $region19: #{_lambda_.11} parent=0 // pred_check_branch
    %142 = sbr.rel (0) target = $region21
  $region20: #{_lambda_.11} parent=0 // pred_region
    _
  $region21: #{_lambda_.11} parent=0 // pred_fallthru
    _
  // Predicated region
  $region22: #{_lambda_.11} parent=0 // pred_check
    _
  $region23: #{_lambda_.11} parent=0 // pred_check_branch
    %144 = sbr.rel (0) target = $region25
  $region24: #{_lambda_.11} parent=0 // pred_region
    _
  $region25: #{_lambda_.11} parent=0 // pred_fallthru
    _

// kernel: _lambda_.12
$region0: #{_lambda_.12}
  #allocation0 [shape = 'u32[]', space=smem, size = 0x4, offset = 0x4, fixed_abs, tag = 'smem constant byte address 0x4 - core index']
  #allocation1 [shape = 'u32[144,128]{1,0:T(1,128)}', space=vmem, size = 0x12000, scoped, tag = 'internal scratch']
  %s0 = inlined_call_operand.vmem [shape: bf16[8,8,8], index: 0, kind: input, shape index: {}]
  %s1 = inlined_call_operand.vmem [shape: bf16[8,8,8], index: 1, kind: input, shape index: {}]
  %s2 = inlined_call_operand.vmem [shape: bf16[8,8,8], index: 2, kind: input, shape index: {}]
  %s3 = inlined_call_operand.vmem [shape: f32[8,8], index: 3, kind: input, shape index: {}]
  %s4 = inlined_call_operand.vmem [shape: f32[8,8], index: 4, kind: input, shape index: {}]
  %s5 = inlined_call_operand.vmem [shape: bf16[8,8,8], index: 5, kind: output, shape index: {}]
  %s6 = sld [smem:[#allocation0]]
  $region53: #{_lambda_.12} parent=0
    _
  %s8 = ssub.s32 1, %s6
  %s9 = scalar_select 0, %s8, %s6
  loop: start=0, step=1, limit=10
  $region2: #{_lambda_.12} parent=0 // loop_pre_header
    _
  $region3: #{_lambda_.12} parent=0 // loop_header
    %s11 = sphi 0, %s15
    %p12 = scmp.ge.s32.totalorder %s11, 10
    %s21 = sphi 0, %s23
    %s24 = sphi 0, %s21
    %s25 = sphi 0, %s24
    %s41 = sphi 0, %s25
    %s47 = sphi 0, %s49
    %s50 = sphi 0, %s47
    %s51 = sphi 0, %s50
    %s67 = sphi 0, %s51
    %s73 = sphi 0, %s75
    %s76 = sphi 0, %s73
    %s77 = sphi 0, %s76
    %s93 = sphi 0, %s77
    %s97 = sphi 0, %s97
    %s99 = sphi 0, %s97
    %s100 = sphi 0, %s99
    %s114 = sphi 0, %s100
    %s118 = sphi 0, %s118
    %s120 = sphi 0, %s118
    %s121 = sphi 0, %s120
    %s135 = sphi 0, %s121
    %s141 = sphi 0, %s143
    %s144 = sphi 0, %s141
    %s145 = sphi 0, %s144
    %s161 = sphi 0, %s145
  $region4: #{_lambda_.12} parent=0 // loop_header_branch
    %14 = sbr.rel (%p12) target = $region8
  $region5: #{_lambda_.12} parent=0 // loop_body
    %s16 = ssub.s32 %s11, 1
    %s17 = ssub.s32 %s11, 2
    %s18 = sadd.s32 %s11, 1
    %s19 = ssub.s32 %s11, %s18
    %p20 = scmp.eq.s32.totalorder %s19, 0
    %s22 = sadd.s32 %s21, 1
    %s23 = scalar_select %p20, %s21, %s22
    %p26 = pneg %p20
    %p27 = scmp.eq.s32.totalorder %s11, 7
    %p28 = por %p26, %p27
    %p29 = scmp.ne.s32.totalorder %s21, %s24
    %p30 = scmp.eq.s32.totalorder %s11, 0
    %p31 = por %p29, %p30
    %p32 = scmp.ne.s32.totalorder %s21, %s24
    %p33 = scmp.eq.s32.totalorder %s16, 7
    %p34 = por %p32, %p33
    %p35 = scmp.ne.s32.totalorder %s24, %s25
    %p36 = scmp.eq.s32.totalorder %s16, 0
    %p37 = por %p35, %p36
    %p38 = scmp.ne.s32.totalorder %s24, %s25
    %p39 = scmp.eq.s32.totalorder %s17, 7
    %p40 = por %p38, %p39
    %p42 = scmp.ne.s32.totalorder %s25, %s41
    %p43 = scmp.eq.s32.totalorder %s17, 0
    %p44 = por %p42, %p43
    %s45 = ssub.s32 %s11, %s18
    %p46 = scmp.eq.s32.totalorder %s45, 0
    %s48 = sadd.s32 %s47, 1
    %s49 = scalar_select %p46, %s47, %s48
    %p52 = pneg %p46
    %p53 = scmp.eq.s32.totalorder %s11, 7
    %p54 = por %p52, %p53
    %p55 = scmp.ne.s32.totalorder %s47, %s50
    %p56 = scmp.eq.s32.totalorder %s11, 0
    %p57 = por %p55, %p56
    %p58 = scmp.ne.s32.totalorder %s47, %s50
    %p59 = scmp.eq.s32.totalorder %s16, 7
    %p60 = por %p58, %p59
    %p61 = scmp.ne.s32.totalorder %s50, %s51
    %p62 = scmp.eq.s32.totalorder %s16, 0
    %p63 = por %p61, %p62
    %p64 = scmp.ne.s32.totalorder %s50, %s51
    %p65 = scmp.eq.s32.totalorder %s17, 7
    %p66 = por %p64, %p65
    %p68 = scmp.ne.s32.totalorder %s51, %s67
    %p69 = scmp.eq.s32.totalorder %s17, 0
    %p70 = por %p68, %p69
    %s71 = ssub.s32 %s11, %s18
    %p72 = scmp.eq.s32.totalorder %s71, 0
    %s74 = sadd.s32 %s73, 1
    %s75 = scalar_select %p72, %s73, %s74
    %p78 = pneg %p72
    %p79 = scmp.eq.s32.totalorder %s11, 7
    %p80 = por %p78, %p79
    %p81 = scmp.ne.s32.totalorder %s73, %s76
    %p82 = scmp.eq.s32.totalorder %s11, 0
    %p83 = por %p81, %p82
    %p84 = scmp.ne.s32.totalorder %s73, %s76
    %p85 = scmp.eq.s32.totalorder %s16, 7
    %p86 = por %p84, %p85
    %p87 = scmp.ne.s32.totalorder %s76, %s77
    %p88 = scmp.eq.s32.totalorder %s16, 0
    %p89 = por %p87, %p88
    %p90 = scmp.ne.s32.totalorder %s76, %s77
    %p91 = scmp.eq.s32.totalorder %s17, 7
    %p92 = por %p90, %p91
    %p94 = scmp.ne.s32.totalorder %s77, %s93
    %p95 = scmp.eq.s32.totalorder %s17, 0
    %p96 = por %p94, %p95
    %s98 = sadd.s32 %s97, 1
    %p101 = scmp.eq.s32.totalorder %s11, 7
    %p102 = scmp.ne.s32.totalorder %s97, %s99
    %p103 = scmp.eq.s32.totalorder %s11, 0
    %p104 = por %p102, %p103
    %p105 = scmp.ne.s32.totalorder %s97, %s99
    %p106 = scmp.eq.s32.totalorder %s16, 7
    %p107 = por %p105, %p106
    %p108 = scmp.ne.s32.totalorder %s99, %s100
    %p109 = scmp.eq.s32.totalorder %s16, 0
    %p110 = por %p108, %p109
    %p111 = scmp.ne.s32.totalorder %s99, %s100
    %p112 = scmp.eq.s32.totalorder %s17, 7
    %p113 = por %p111, %p112
    %p115 = scmp.ne.s32.totalorder %s100, %s114
    %p116 = scmp.eq.s32.totalorder %s17, 0
    %p117 = por %p115, %p116
    %s119 = sadd.s32 %s118, 1
    %p122 = scmp.eq.s32.totalorder %s11, 7
    %p123 = scmp.ne.s32.totalorder %s118, %s120
    %p124 = scmp.eq.s32.totalorder %s11, 0
    %p125 = por %p123, %p124
    %p126 = scmp.ne.s32.totalorder %s118, %s120
    %p127 = scmp.eq.s32.totalorder %s16, 7
    %p128 = por %p126, %p127
    %p129 = scmp.ne.s32.totalorder %s120, %s121
    %p130 = scmp.eq.s32.totalorder %s16, 0
    %p131 = por %p129, %p130
    %p132 = scmp.ne.s32.totalorder %s120, %s121
    %p133 = scmp.eq.s32.totalorder %s17, 7
    %p134 = por %p132, %p133
    %p136 = scmp.ne.s32.totalorder %s121, %s135
    %p137 = scmp.eq.s32.totalorder %s17, 0
    %p138 = por %p136, %p137
    %s139 = ssub.s32 %s11, %s18
    %p140 = scmp.eq.s32.totalorder %s139, 0
    %s142 = sadd.s32 %s141, 1
    %s143 = scalar_select %p140, %s141, %s142
    %p146 = pneg %p140
    %p147 = scmp.eq.s32.totalorder %s11, 7
    %p148 = por %p146, %p147
    %p149 = scmp.ne.s32.totalorder %s141, %s144
    %p150 = scmp.eq.s32.totalorder %s11, 0
    %p151 = por %p149, %p150
    %p152 = scmp.ne.s32.totalorder %s141, %s144
    %p153 = scmp.eq.s32.totalorder %s16, 7
    %p154 = por %p152, %p153
    %p155 = scmp.ne.s32.totalorder %s144, %s145
    %p156 = scmp.eq.s32.totalorder %s16, 0
    %p157 = por %p155, %p156
    %p158 = scmp.ne.s32.totalorder %s144, %s145
    %p159 = scmp.eq.s32.totalorder %s17, 7
    %p160 = por %p158, %p159
    %p162 = scmp.ne.s32.totalorder %s145, %s161
    %p163 = scmp.eq.s32.totalorder %s17, 0
    %p164 = por %p162, %p163
    %p165 = scmp.le.s32.totalorder 1, %s11
    %p166 = scmp.lt.s32.totalorder %s11, 9
    %p167 = pnand %p165, %p166
    %p168 = pneg %p167
    // Predicated region
    $region9: #{_lambda_.12} parent=5 // pred_check
      _
    $region10: #{_lambda_.12} parent=5 // pred_check_branch
      %170 = sbr.rel (%p167) target = $region12
    $region11: #{_lambda_.12} parent=5 // pred_region
      %s171 = ssub.s32 %s11, 1
      // Predicated region
      $region13: #{_lambda_.12} parent=11 // pred_check
        %p172 = pneg %p110
      $region14: #{_lambda_.12} parent=11 // pred_check_branch
        %174 = sbr.rel (%p172) target = $region16
      $region15: #{_lambda_.12} parent=11 // pred_region
        _
      $region16: #{_lambda_.12} parent=11 // pred_fallthru
        _
      // Predicated region
      $region17: #{_lambda_.12} parent=11 // pred_check
        %p175 = pneg %p131
      $region18: #{_lambda_.12} parent=11 // pred_check_branch
        %177 = sbr.rel (%p175) target = $region20
      $region19: #{_lambda_.12} parent=11 // pred_region
        _
      $region20: #{_lambda_.12} parent=11 // pred_fallthru
        _
    $region12: #{_lambda_.12} parent=5 // pred_fallthru
      _
    %p178 = scmp.lt.s32.totalorder %s11, 8
    // Predicated region
    $region21: #{_lambda_.12} parent=5 // pred_check
      %p179 = pneg %p178
    $region22: #{_lambda_.12} parent=5 // pred_check_branch
      %181 = sbr.rel (%p179) target = $region24
    $region23: #{_lambda_.12} parent=5 // pred_region
      // Predicated region
      $region25: #{_lambda_.12} parent=23 // pred_check
        %p182 = pneg %p31
      $region26: #{_lambda_.12} parent=23 // pred_check_branch
        %184 = sbr.rel (%p182) target = $region28
      $region27: #{_lambda_.12} parent=23 // pred_region
        %p185 = scmp.lt.s32.totalorder %s11, 7
        %s186 = scalar_select %p185, %s11, 7
        %s187 = smul.addr %s186, 4
        %s188 = scalar_lea.vmem %s0, %s187
      $region28: #{_lambda_.12} parent=23 // pred_fallthru
        _
      // Predicated region
      $region29: #{_lambda_.12} parent=23 // pred_check
        %p189 = pneg %p57
      $region30: #{_lambda_.12} parent=23 // pred_check_branch
        %191 = sbr.rel (%p189) target = $region32
      $region31: #{_lambda_.12} parent=23 // pred_region
        %p192 = scmp.lt.s32.totalorder %s11, 7
        %s193 = scalar_select %p192, %s11, 7
        %s194 = smul.addr %s193, 4
        %s195 = scalar_lea.vmem %s1, %s194
      $region32: #{_lambda_.12} parent=23 // pred_fallthru
        _
      // Predicated region
      $region33: #{_lambda_.12} parent=23 // pred_check
        %p196 = pneg %p83
      $region34: #{_lambda_.12} parent=23 // pred_check_branch
        %198 = sbr.rel (%p196) target = $region36
      $region35: #{_lambda_.12} parent=23 // pred_region
        %p199 = scmp.lt.s32.totalorder %s11, 7
        %s200 = scalar_select %p199, %s11, 7
        %s201 = smul.addr %s200, 4
        %s202 = scalar_lea.vmem %s2, %s201
      $region36: #{_lambda_.12} parent=23 // pred_fallthru
        _
    $region24: #{_lambda_.12} parent=5 // pred_fallthru
      _
    %p203 = scmp.le.s32.totalorder 1, %s11
    %p204 = scmp.lt.s32.totalorder %s11, 9
    %p205 = pnand %p203, %p204
    %p206 = pneg %p205
    // Predicated region
    $region37: #{_lambda_.12} parent=5 // pred_check
      _
    $region38: #{_lambda_.12} parent=5 // pred_check_branch
      %208 = sbr.rel (%p205) target = $region40
    $region39: #{_lambda_.12} parent=5 // pred_region
      %s209 = ssub.s32 %s11, 1
      %p210 = scmp.lt.s32.totalorder %s16, 7
      %s211 = scalar_select %p210, %s16, 7
      %s212 = smul.addr %s211, 4
      %s213 = scalar_lea.vmem %s0, %s212
      %p214 = pneg %p37
      %p215 = pneg %p34
      %p216 = scmp.lt.s32.totalorder %s16, 7
      %s217 = scalar_select %p216, %s16, 7
      %s218 = smul.addr %s217, 4
      %s219 = scalar_lea.vmem %s1, %s218
      %p220 = pneg %p63
      %p221 = pneg %p60
      %p222 = scmp.lt.s32.totalorder %s16, 7
      %s223 = scalar_select %p222, %s16, 7
      %s224 = smul.addr %s223, 4
      %s225 = scalar_lea.vmem %s2, %s224
      %p226 = pneg %p89
      %p227 = pneg %p86
      %p228 = pneg %p110
      %p229 = pneg %p107
      %p230 = pneg %p131
      %p231 = pneg %p128
      %p232 = pneg %p157
      %p233 = pneg %p154
      %p234 = scmp.lt.s32.totalorder %s16, 7
      %s235 = scalar_select %p234, %s16, 7
      %s236 = smul.addr %s235, 4
      %s237 = scalar_lea.vmem %s5, %s236
      %p238 = scmp.lt.s32.totalorder %s16, 7
      %s239 = scalar_select %p238, %s16, 7
      %s240 = smul.addr %s239, 4
      %s241 = scalar_lea.vmem %s0, %s240
      %p242 = scmp.lt.s32.totalorder %s16, 7
      %s243 = scalar_select %p242, %s16, 7
      %s244 = smul.addr %s243, 4
      %s245 = scalar_lea.vmem %s1, %s244
      %p246 = scmp.lt.s32.totalorder %s16, 7
      %s247 = scalar_select %p246, %s16, 7
      %s248 = smul.addr %s247, 4
      %s249 = scalar_lea.vmem %s2, %s248
      %p250 = scmp.lt.s32.totalorder %s16, 7
      %s251 = scalar_select %p250, %s16, 7
      %s252 = smul.addr %s251, 4
      %s253 = scalar_lea.vmem %s5, %s252
      %v255 = vld [vmem:[%s3] sm:$0xff]
      %v256 = vld [vmem:[%s4] sm:$0xff]
      %v257 = vld [vmem:[%s241] sm:$0xf]
      %v258 = vunpack.c.l.bf16 %v257
      %v259 = vld [vmem:[%s245] sm:$0xf]
      %v260 = vunpack.c.l.bf16 %v259
      %v261 = vmul.f32 %v258, %v255
      %v262 = vsub.f32 0.0, %v258
      %264 = vrot.lane.b32.xlu0 %v262, 124
      %v265 = vpop.permute.xlu0 %264
      %268 = vrot.lane.b32.xlu0 %v258, 4
      %v269 = vpop.permute.xlu0 %268
      %vm271 = vcmask 31744
      %v272 = vsel %vm271, %v265, %v269
      %v273 = vmul.f32 %v272, %v256
      %v274 = vadd.f32 %v261, %v273
      %v275 = vpack.c.bf16 %v274, %v274
      %v276 = vmul.f32 %v260, %v255
      %v277 = vsub.f32 0.0, %v260
      %279 = vrot.lane.b32.xlu0 %v277, 124
      %v280 = vpop.permute.xlu0 %279
      %283 = vrot.lane.b32.xlu0 %v260, 4
      %v284 = vpop.permute.xlu0 %283
      %v286 = vsel %vm271, %v280, %v284
      %v287 = vmul.f32 %v286, %v256
      %v288 = vadd.f32 %v276, %v287
      %v289 = vpack.c.bf16 %v288, %v288
      %vm290 = vcmask 64512
      %v292 = vsel %vm290, %v275, 0
      %v295 = vsel %vm290, %v289, 0
      %297 = vmatprep.subr.bf16.mxu0 0
      %298 = vmatpush1.bf16.xpose.msra.mxu0 %v295
      %299 = vmatprep.subr.bf16.mxu0 0
      %300 = vmatpush1.bf16.xpose.msra.mxu0 0
      %301 = vmatprep.subr.bf16.mxu0 0
      %302 = vmatpush1.bf16.xpose.msra.mxu0 0
      %303 = vmatprep.subr.bf16.mxu0 0
      %304 = vmatpush1.bf16.xpose.msra.mxu0 0
      %305 = vmatprep.subr.bf16.mxu0 0
      %306 = vmatpush1.bf16.xpose.msra.mxu0 0
      %307 = vmatprep.subr.bf16.mxu0 0
      %308 = vmatpush1.bf16.xpose.msra.mxu0 0
      %309 = vmatprep.subr.bf16.mxu0 0
      %310 = vmatpush1.bf16.xpose.msra.mxu0 0
      %311 = vmatprep.subr.bf16.mxu0 0
      %312 = vmatpush1.bf16.xpose.msra.mxu0 0
      %313 = vmatprep.subr.bf16.mxu0 0
      %314 = vmatpush1.bf16.xpose.msra.mxu0 0
      %315 = vmatprep.subr.bf16.mxu0 0
      %316 = vmatpush1.bf16.xpose.msra.mxu0 0
      %317 = vmatprep.subr.bf16.mxu0 0
      %318 = vmatpush1.bf16.xpose.msra.mxu0 0
      %319 = vmatprep.subr.bf16.mxu0 0
      %320 = vmatpush1.bf16.xpose.msra.mxu0 0
      %321 = vmatprep.subr.bf16.mxu0 0
      %322 = vmatpush1.bf16.xpose.msra.mxu0 0
      %323 = vmatprep.subr.bf16.mxu0 0
      %324 = vmatpush1.bf16.xpose.msra.mxu0 0
      %325 = vmatprep.subr.bf16.mxu0 0
      %326 = vmatpush1.bf16.xpose.msra.mxu0 0
      %327 = vmatprep.subr.bf16.mxu0 0
      %328 = vmatpush1.bf16.xpose.msra.mxu0 0
      %329 = vmatprep.mubr.bf16.mxu0 0
      %330 = vmatmul.mubr.bf16.gmra.mrb[0].mxu0 %v292
      %v331 = vpop.f32.mrb[0].mxu0
      %v332 = vadd.f32 0.0, %v331
      %v333 = vpop.f32.mrb[0].mxu0
      %v334 = vpop.f32.mrb[0].mxu0
      %v335 = vpop.f32.mrb[0].mxu0
      %336 = vdwg.mxu0
      %v337 = vmul.f32 %v332, 0.35355338
      %v338 = vlaneseq
      %v339 = vshrl.u32 %v338, 7
      %v340 = vlaneseq
      %v341 = vand.u32 %v340, 127
      %vm342 = vcmp.le.s32.totalorder %v341, %v339
      %v343 = vsel %vm342, %v337, -1e+30
      %v344 = vsel %vm290, %v343, -inf
      %345 = vmax.xlane.f32.xlu0 %v344
      %v346 = vpop.xlane.xlu0 %345
      %v347 = vsub.f32 %v343, %v346
      %v348 = vmul.f32 %v347, 1.442695
      %v349 = vpow.pop %v348
      %v350 = vsel %vm290, %v349, 0.0
      %351 = vadd.xlane.f32.xlu0 %v350
      %v352 = vpop.xlane.xlu0 %351
      %v353 = vrcp.pop %v352
      %v354 = vmul.f32 %v349, %v353
      %v355 = vpack.c.bf16 %v354, %v354
      %v356 = vld [vmem:[%s249] sm:$0xf]
      %v358 = vsel %vm290, %v355, 0
      %vm360 = vcmask 1043456
      %v362 = vsel %vm360, %v356, 0
      %364 = vmatprep.subr.bf16.mxu0 0
      %365 = vmatpush1.bf16.msra.mxu0 %v362
      %366 = vmatprep.subr.bf16.mxu0 0
      %367 = vmatpush1.bf16.msra.mxu0 0
      %368 = vmatprep.subr.bf16.mxu0 0
      %369 = vmatpush1.bf16.msra.mxu0 0
      %370 = vmatprep.subr.bf16.mxu0 0
      %371 = vmatpush1.bf16.msra.mxu0 0
      %372 = vmatprep.subr.bf16.mxu0 0
      %373 = vmatpush1.bf16.msra.mxu0 0
      %374 = vmatprep.subr.bf16.mxu0 0
      %375 = vmatpush1.bf16.msra.mxu0 0
      %376 = vmatprep.subr.bf16.mxu0 0
      %377 = vmatpush1.bf16.msra.mxu0 0
      %378 = vmatprep.subr.bf16.mxu0 0
      %379 = vmatpush1.bf16.msra.mxu0 0
      %380 = vmatprep.subr.bf16.mxu0 0
      %381 = vmatpush1.bf16.msra.mxu0 0
      %382 = vmatprep.subr.bf16.mxu0 0
      %383 = vmatpush1.bf16.msra.mxu0 0
      %384 = vmatprep.subr.bf16.mxu0 0
      %385 = vmatpush1.bf16.msra.mxu0 0
      %386 = vmatprep.subr.bf16.mxu0 0
      %387 = vmatpush1.bf16.msra.mxu0 0
      %388 = vmatprep.subr.bf16.mxu0 0
      %389 = vmatpush1.bf16.msra.mxu0 0
      %390 = vmatprep.subr.bf16.mxu0 0
      %391 = vmatpush1.bf16.msra.mxu0 0
      %392 = vmatprep.subr.bf16.mxu0 0
      %393 = vmatpush1.bf16.msra.mxu0 0
      %394 = vmatprep.subr.bf16.mxu0 0
      %395 = vmatpush1.bf16.msra.mxu0 0
      %396 = vmatprep.mubr.bf16.mxu0 0
      %397 = vmatmul.mubr.bf16.gmra.mrb[0].mxu0 %v358
      %v398 = vpop.f32.mrb[0].mxu0
      %v399 = vadd.f32 0.0, %v398
      %v400 = vpop.f32.mrb[0].mxu0
      %v401 = vpop.f32.mrb[0].mxu0
      %v402 = vpop.f32.mrb[0].mxu0
      %403 = vdwg.mxu0
      %v404 = vpack.c.bf16 %v399, %v399
      %vm405 = vcmask 60416
      %406 = vst.msk [vmem:[%s253] sm:$0xf] %vm405, %v404
      %p407 = scmp.lt.s32.totalorder %s16, 7
      %s408 = scalar_select %p407, %s16, 7
      %s409 = smul.addr %s408, 4
      %s410 = scalar_lea.vmem %s5, %s409
      // Predicated region
      $region41: #{_lambda_.12} parent=39 // pred_check
        %p411 = pneg %p154
      $region42: #{_lambda_.12} parent=39 // pred_check_branch
        %413 = sbr.rel (%p411) target = $region44
      $region43: #{_lambda_.12} parent=39 // pred_region
        _
      $region44: #{_lambda_.12} parent=39 // pred_fallthru
        _
    $region40: #{_lambda_.12} parent=5 // pred_fallthru
      _
    %p414 = scmp.le.s32.totalorder 2, %s11
    // Predicated region
    $region45: #{_lambda_.12} parent=5 // pred_check
      %p415 = pneg %p414
    $region46: #{_lambda_.12} parent=5 // pred_check_branch
      %417 = sbr.rel (%p415) target = $region48
    $region47: #{_lambda_.12} parent=5 // pred_region
      %s418 = ssub.s32 %s11, 2
      // Predicated region
      $region49: #{_lambda_.12} parent=47 // pred_check
        %p419 = pneg %p160
      $region50: #{_lambda_.12} parent=47 // pred_check_branch
        %421 = sbr.rel (%p419) target = $region52
      $region51: #{_lambda_.12} parent=47 // pred_region
        %p422 = scmp.lt.s32.totalorder %s17, 7
        %s423 = scalar_select %p422, %s17, 7
        %s424 = smul.addr %s423, 4
        %s425 = scalar_lea.vmem %s5, %s424
      $region52: #{_lambda_.12} parent=47 // pred_fallthru
        _
    $region48: #{_lambda_.12} parent=5 // pred_fallthru
      _
  $region6: #{_lambda_.12} parent=0 // loop_footer
    %s15 = sadd.s32 1, %s11
  $region7: #{_lambda_.12} parent=0 // loop_footer_branch
    %10 = sbr.rel target = $region3
  $region8: #{_lambda_.12} parent=0 // loop_exit
    _

// kernel: _lambda_.13
$region0: #{_lambda_.13}
  #allocation0 [shape = 'u32[]', space=smem, size = 0x4, offset = 0x4, fixed_abs, tag = 'smem constant byte address 0x4 - core index']
  #allocation1 [shape = 'u32[144,128]{1,0:T(1,128)}', space=vmem, size = 0x12000, scoped, tag = 'internal scratch']
  %s0 = inlined_call_operand.vmem [shape: bf16[16,32], index: 0, kind: input, shape index: {}]
  %s1 = inlined_call_operand.vmem [shape: s8[32,32], index: 1, kind: input, shape index: {}]
  %s2 = inlined_call_operand.vmem [shape: f32[1,32], index: 2, kind: input, shape index: {}]
  %s3 = inlined_call_operand.vmem [shape: f32[16,32], index: 3, kind: input, shape index: {}]
  %s4 = inlined_call_operand.vmem [shape: f32[16,32], index: 4, kind: output, shape index: {}]
  %s5 = sld [smem:[#allocation0]]
  $region26: #{_lambda_.13} parent=0
    _
  %s7 = ssub.s32 1, %s5
  %s8 = scalar_select 0, %s7, %s5
  // Predicated region
  $region2: #{_lambda_.13} parent=0 // pred_check
    _
  $region3: #{_lambda_.13} parent=0 // pred_check_branch
    %10 = sbr.rel (0) target = $region5
  $region4: #{_lambda_.13} parent=0 // pred_region
    _
  $region5: #{_lambda_.13} parent=0 // pred_fallthru
    _
  // Predicated region
  $region6: #{_lambda_.13} parent=0 // pred_check
    _
  $region7: #{_lambda_.13} parent=0 // pred_check_branch
    %12 = sbr.rel (0) target = $region9
  $region8: #{_lambda_.13} parent=0 // pred_region
    _
  $region9: #{_lambda_.13} parent=0 // pred_fallthru
    _
  // Predicated region
  $region10: #{_lambda_.13} parent=0 // pred_check
    _
  $region11: #{_lambda_.13} parent=0 // pred_check_branch
    %14 = sbr.rel (0) target = $region13
  $region12: #{_lambda_.13} parent=0 // pred_region
    _
  $region13: #{_lambda_.13} parent=0 // pred_fallthru
    _
  // Predicated region
  $region14: #{_lambda_.13} parent=0 // pred_check
    _
  $region15: #{_lambda_.13} parent=0 // pred_check_branch
    %16 = sbr.rel (0) target = $region17
  $region16: #{_lambda_.13} parent=0 // pred_region
    _
  $region17: #{_lambda_.13} parent=0 // pred_fallthru
    _
  %v18 = vld [vmem:[%s0] sm:$0xf]
  %v19 = vld [vmem:[%s0 + $0x4] sm:$0xf]
  %v20 = vunpack.c.l.bf16 %v18
  %v21 = vunpack.c.l.bf16 %v19
  %v22 = vand.u32 2147483647, %v20
  %v23 = vand.u32 2147483647, %v21
  %vm24 = vcmask 261120
  %v25 = vsel %vm24, %v22, -inf
  %26 = vmax.xlane.f32.xlu0 %v25
  %v27 = vpop.xlane.xlu0 %26
  %v28 = vsel %vm24, %v23, -inf
  %29 = vmax.xlane.f32.xlu0 %v28
  %v30 = vpop.xlane.xlu0 %29
  %v31 = vmax.f32 %v27, 1e-05
  %v32 = vmax.f32 %v30, 1e-05
  %v33 = vrcp.pop %v31
  %v34 = vmul.f32 127.0, %v33
  %v35 = vrcp.pop %v32
  %v36 = vmul.f32 127.0, %v35
  %v37 = vmul.f32 %v20, %v34
  %v38 = vmul.f32 %v21, %v36
  %v39 = vround.ne.pseudo %v37
  %v40 = vround.ne.pseudo %v38
  %v41 = vmax.f32 %v39, -128.0
  %v42 = vmax.f32 %v40, -128.0
  %v43 = vmin.f32 %v41, 127.0
  %v44 = vmin.f32 %v42, 127.0
  %v45 = vpack.c.bf16 %v44, %v43
  %v46 = vmul.f32 %v31, 0.007874016
  %v47 = vmul.f32 %v32, 0.007874016
  %v48 = vld [vmem:[%s1] sm:$0xff]
  %v49 = vunpack.c.l.s8.bf16 %v48
  %v50 = vunpack.c.h.s8.bf16 %v48
  %v52 = vsel %vm24, %v45, 0
  %54 = vmatprep.subr.bf16.mxu0 0
  %55 = vmatpush1.bf16.msra.mxu0 %v49
  %56 = vmatprep.subr.bf16.mxu0 0
  %57 = vmatpush1.bf16.msra.mxu0 %v50
  %58 = vmatprep.subr.bf16.mxu0 0
  %59 = vmatpush1.bf16.msra.mxu0 0
  %60 = vmatprep.subr.bf16.mxu0 0
  %61 = vmatpush1.bf16.msra.mxu0 0
  %62 = vmatprep.subr.bf16.mxu0 0
  %63 = vmatpush1.bf16.msra.mxu0 0
  %64 = vmatprep.subr.bf16.mxu0 0
  %65 = vmatpush1.bf16.msra.mxu0 0
  %66 = vmatprep.subr.bf16.mxu0 0
  %67 = vmatpush1.bf16.msra.mxu0 0
  %68 = vmatprep.subr.bf16.mxu0 0
  %69 = vmatpush1.bf16.msra.mxu0 0
  %70 = vmatprep.subr.bf16.mxu0 0
  %71 = vmatpush1.bf16.msra.mxu0 0
  %72 = vmatprep.subr.bf16.mxu0 0
  %73 = vmatpush1.bf16.msra.mxu0 0
  %74 = vmatprep.subr.bf16.mxu0 0
  %75 = vmatpush1.bf16.msra.mxu0 0
  %76 = vmatprep.subr.bf16.mxu0 0
  %77 = vmatpush1.bf16.msra.mxu0 0
  %78 = vmatprep.subr.bf16.mxu0 0
  %79 = vmatpush1.bf16.msra.mxu0 0
  %80 = vmatprep.subr.bf16.mxu0 0
  %81 = vmatpush1.bf16.msra.mxu0 0
  %82 = vmatprep.subr.bf16.mxu0 0
  %83 = vmatpush1.bf16.msra.mxu0 0
  %84 = vmatprep.subr.bf16.mxu0 0
  %85 = vmatpush1.bf16.msra.mxu0 0
  %86 = vmatprep.mubr.bf16.mxu0 0
  %87 = vmatmul.mubr.bf16.gmra.mrb[0].mxu0 %v52
  %v88 = vpop.f32.mrb[0].mxu0
  %v89 = vadd.f32 0.0, %v88
  %v90 = vpop.f32.mrb[0].mxu0
  %v91 = vpop.f32.mrb[0].mxu0
  %v92 = vadd.f32 0.0, %v91
  %v93 = vpop.f32.mrb[0].mxu0
  %94 = vdwg.mxu0
  %v95 = vld [vmem:[%s3] sm:$0xff]
  %v96 = vld [vmem:[%s3 + $0x8] sm:$0xff]
  %v97 = vld [vmem:[%s2] sm:$0x1]
  %v99 = vlaneseq
  %v100 = vshrl.u32 %v99, 7
  %v101 = vsub.s32 0, %v100
  %v102 = vrot.slane %v97, %v101
  %v104 = vmul.f32 %v89, %v102
  %v105 = vmul.f32 %v92, %v102
  %v106 = vmul.f32 %v104, %v46
  %v107 = vmul.f32 %v105, %v47
  %v108 = vadd.f32 %v95, %v106
  %v109 = vadd.f32 %v96, %v107
  %110 = vst.msk [vmem:[%s4] sm:$0xff] %vm24, %v108
  %111 = vst.msk [vmem:[%s4 + $0x8] sm:$0xff] %vm24, %v109
  // Predicated region
  $region18: #{_lambda_.13} parent=0 // pred_check
    _
  $region19: #{_lambda_.13} parent=0 // pred_check_branch
    %113 = sbr.rel (0) target = $region21
  $region20: #{_lambda_.13} parent=0 // pred_region
    _
  $region21: #{_lambda_.13} parent=0 // pred_fallthru
    _
  // Predicated region
  $region22: #{_lambda_.13} parent=0 // pred_check
    _
  $region23: #{_lambda_.13} parent=0 // pred_check_branch
    %115 = sbr.rel (0) target = $region25
  $region24: #{_lambda_.13} parent=0 // pred_region
    _
  $region25: #{_lambda_.13} parent=0 // pred_fallthru
    _

// kernel: _lambda_.14
$region0: #{_lambda_.14}
  #allocation0 [shape = 'u32[]', space=smem, size = 0x4, offset = 0x4, fixed_abs, tag = 'smem constant byte address 0x4 - core index']
  #allocation1 [shape = 'u32[144,128]{1,0:T(1,128)}', space=vmem, size = 0x12000, scoped, tag = 'internal scratch']
  %s0 = inlined_call_operand.vmem [shape: f32[16,32], index: 0, kind: input, shape index: {}]
  %s1 = inlined_call_operand.vmem [shape: f32[1,32], index: 1, kind: input, shape index: {}]
  %s2 = inlined_call_operand.vmem [shape: s8[32,64], index: 2, kind: input, shape index: {}]
  %s3 = inlined_call_operand.vmem [shape: f32[1,64], index: 3, kind: input, shape index: {}]
  %s4 = inlined_call_operand.vmem [shape: s8[32,64], index: 4, kind: input, shape index: {}]
  %s5 = inlined_call_operand.vmem [shape: f32[1,64], index: 5, kind: input, shape index: {}]
  %s6 = inlined_call_operand.vmem [shape: bf16[16,64], index: 6, kind: output, shape index: {}]
  %s7 = sld [smem:[#allocation0]]
  $region34: #{_lambda_.14} parent=0
    _
  %s9 = ssub.s32 1, %s7
  %s10 = scalar_select 0, %s9, %s7
  // Predicated region
  $region2: #{_lambda_.14} parent=0 // pred_check
    _
  $region3: #{_lambda_.14} parent=0 // pred_check_branch
    %12 = sbr.rel (0) target = $region5
  $region4: #{_lambda_.14} parent=0 // pred_region
    _
  $region5: #{_lambda_.14} parent=0 // pred_fallthru
    _
  // Predicated region
  $region6: #{_lambda_.14} parent=0 // pred_check
    _
  $region7: #{_lambda_.14} parent=0 // pred_check_branch
    %14 = sbr.rel (0) target = $region9
  $region8: #{_lambda_.14} parent=0 // pred_region
    _
  $region9: #{_lambda_.14} parent=0 // pred_fallthru
    _
  // Predicated region
  $region10: #{_lambda_.14} parent=0 // pred_check
    _
  $region11: #{_lambda_.14} parent=0 // pred_check_branch
    %16 = sbr.rel (0) target = $region13
  $region12: #{_lambda_.14} parent=0 // pred_region
    _
  $region13: #{_lambda_.14} parent=0 // pred_fallthru
    _
  // Predicated region
  $region14: #{_lambda_.14} parent=0 // pred_check
    _
  $region15: #{_lambda_.14} parent=0 // pred_check_branch
    %18 = sbr.rel (0) target = $region17
  $region16: #{_lambda_.14} parent=0 // pred_region
    _
  $region17: #{_lambda_.14} parent=0 // pred_fallthru
    _
  // Predicated region
  $region18: #{_lambda_.14} parent=0 // pred_check
    _
  $region19: #{_lambda_.14} parent=0 // pred_check_branch
    %20 = sbr.rel (0) target = $region21
  $region20: #{_lambda_.14} parent=0 // pred_region
    _
  $region21: #{_lambda_.14} parent=0 // pred_fallthru
    _
  // Predicated region
  $region22: #{_lambda_.14} parent=0 // pred_check
    _
  $region23: #{_lambda_.14} parent=0 // pred_check_branch
    %22 = sbr.rel (0) target = $region25
  $region24: #{_lambda_.14} parent=0 // pred_region
    _
  $region25: #{_lambda_.14} parent=0 // pred_fallthru
    _
  %v24 = vld [vmem:[%s0] sm:$0xff]
  %v25 = vld [vmem:[%s0 + $0x8] sm:$0xff]
  %v26 = vld [vmem:[%s1] sm:$0x1]
  %v27 = vmul.f32 %v24, %v24
  %v28 = vmul.f32 %v25, %v25
  %vm29 = vcmask 261120
  %v30 = vsel %vm29, %v27, 0.0
  %31 = vadd.xlane.f32.xlu0 %v30
  %v32 = vpop.xlane.xlu0 %31
  %v33 = vsel %vm29, %v28, 0.0
  %34 = vadd.xlane.f32.xlu0 %v33
  %v35 = vpop.xlane.xlu0 %34
  %v36 = vrcp.pop 32.0
  %v37 = vmul.f32 %v32, %v36
  %v38 = vmul.f32 %v35, %v36
  %v39 = vadd.f32 %v37, 1e-06
  %v40 = vadd.f32 %v38, 1e-06
  %v41 = vrsqrt.pop %v39
  %v42 = vrsqrt.pop %v40
  %v43 = vmul.f32 %v24, %v41
  %v44 = vmul.f32 %v25, %v42
  %v46 = vlaneseq
  %v47 = vshrl.u32 %v46, 7
  %v48 = vsub.s32 0, %v47
  %v49 = vrot.slane %v26, %v48
  %v51 = vmul.f32 %v43, %v49
  %v52 = vmul.f32 %v44, %v49
  %v53 = vand.u32 2147483647, %v51
  %v54 = vand.u32 2147483647, %v52
  %v55 = vsel %vm29, %v53, -inf
  %56 = vmax.xlane.f32.xlu0 %v55
  %v57 = vpop.xlane.xlu0 %56
  %v58 = vsel %vm29, %v54, -inf
  %59 = vmax.xlane.f32.xlu0 %v58
  %v60 = vpop.xlane.xlu0 %59
  %v61 = vmax.f32 %v57, 1e-05
  %v62 = vmax.f32 %v60, 1e-05
  %v63 = vrcp.pop %v61
  %v64 = vmul.f32 127.0, %v63
  %v65 = vrcp.pop %v62
  %v66 = vmul.f32 127.0, %v65
  %v67 = vmul.f32 %v51, %v64
  %v68 = vmul.f32 %v52, %v66
  %v69 = vround.ne.pseudo %v67
  %v70 = vround.ne.pseudo %v68
  %v71 = vmax.f32 %v69, -128.0
  %v72 = vmax.f32 %v70, -128.0
  %v73 = vmin.f32 %v71, 127.0
  %v74 = vmin.f32 %v72, 127.0
  %v75 = vpack.c.bf16 %v74, %v73
  %v76 = vmul.f32 %v61, 0.007874016
  %v77 = vmul.f32 %v62, 0.007874016
  %v78 = vld [vmem:[%s2] sm:$0xff]
  %v79 = vunpack.c.l.s8.bf16 %v78
  %v80 = vunpack.c.h.s8.bf16 %v78
  %v82 = vsel %vm29, %v75, 0
  %84 = vmatprep.subr.bf16.mxu0 0
  %85 = vmatpush1.bf16.msra.mxu0 %v79
  %86 = vmatprep.subr.bf16.mxu0 0
  %87 = vmatpush1.bf16.msra.mxu0 %v80
  %88 = vmatprep.subr.bf16.mxu0 0
  %89 = vmatpush1.bf16.msra.mxu0 0
  %90 = vmatprep.subr.bf16.mxu0 0
  %91 = vmatpush1.bf16.msra.mxu0 0
  %92 = vmatprep.subr.bf16.mxu0 0
  %93 = vmatpush1.bf16.msra.mxu0 0
  %94 = vmatprep.subr.bf16.mxu0 0
  %95 = vmatpush1.bf16.msra.mxu0 0
  %96 = vmatprep.subr.bf16.mxu0 0
  %97 = vmatpush1.bf16.msra.mxu0 0
  %98 = vmatprep.subr.bf16.mxu0 0
  %99 = vmatpush1.bf16.msra.mxu0 0
  %100 = vmatprep.subr.bf16.mxu0 0
  %101 = vmatpush1.bf16.msra.mxu0 0
  %102 = vmatprep.subr.bf16.mxu0 0
  %103 = vmatpush1.bf16.msra.mxu0 0
  %104 = vmatprep.subr.bf16.mxu0 0
  %105 = vmatpush1.bf16.msra.mxu0 0
  %106 = vmatprep.subr.bf16.mxu0 0
  %107 = vmatpush1.bf16.msra.mxu0 0
  %108 = vmatprep.subr.bf16.mxu0 0
  %109 = vmatpush1.bf16.msra.mxu0 0
  %110 = vmatprep.subr.bf16.mxu0 0
  %111 = vmatpush1.bf16.msra.mxu0 0
  %112 = vmatprep.subr.bf16.mxu0 0
  %113 = vmatpush1.bf16.msra.mxu0 0
  %114 = vmatprep.subr.bf16.mxu0 0
  %115 = vmatpush1.bf16.msra.mxu0 0
  %116 = vmatprep.mubr.bf16.mxu0 0
  %117 = vmatmul.mubr.bf16.gmra.mrb[0].mxu0 %v82
  %v118 = vpop.f32.mrb[0].mxu0
  %v119 = vadd.f32 0.0, %v118
  %v120 = vpop.f32.mrb[0].mxu0
  %v121 = vpop.f32.mrb[0].mxu0
  %v122 = vadd.f32 0.0, %v121
  %v123 = vpop.f32.mrb[0].mxu0
  %124 = vdwg.mxu0
  %v125 = vld [vmem:[%s3] sm:$0x1]
  %v127 = vlaneseq
  %v128 = vshrl.u32 %v127, 7
  %v129 = vsub.s32 0, %v128
  %v130 = vrot.slane %v125, %v129
  %v132 = vmul.f32 %v130, %v76
  %v133 = vmul.f32 %v130, %v77
  %v134 = vmul.f32 %v119, %v132
  %v135 = vmul.f32 %v122, %v133
  %v136 = vld [vmem:[%s4] sm:$0xff]
  %v137 = vunpack.c.l.s8.bf16 %v136
  %v138 = vunpack.c.h.s8.bf16 %v136
  %139 = vmatprep.subr.bf16.mxu0 0
  %140 = vmatpush1.bf16.msra.mxu0 %v137
  %141 = vmatprep.subr.bf16.mxu0 0
  %142 = vmatpush1.bf16.msra.mxu0 %v138
  %143 = vmatprep.subr.bf16.mxu0 0
  %144 = vmatpush1.bf16.msra.mxu0 0
  %145 = vmatprep.subr.bf16.mxu0 0
  %146 = vmatpush1.bf16.msra.mxu0 0
  %147 = vmatprep.subr.bf16.mxu0 0
  %148 = vmatpush1.bf16.msra.mxu0 0
  %149 = vmatprep.subr.bf16.mxu0 0
  %150 = vmatpush1.bf16.msra.mxu0 0
  %151 = vmatprep.subr.bf16.mxu0 0
  %152 = vmatpush1.bf16.msra.mxu0 0
  %153 = vmatprep.subr.bf16.mxu0 0
  %154 = vmatpush1.bf16.msra.mxu0 0
  %155 = vmatprep.subr.bf16.mxu0 0
  %156 = vmatpush1.bf16.msra.mxu0 0
  %157 = vmatprep.subr.bf16.mxu0 0
  %158 = vmatpush1.bf16.msra.mxu0 0
  %159 = vmatprep.subr.bf16.mxu0 0
  %160 = vmatpush1.bf16.msra.mxu0 0
  %161 = vmatprep.subr.bf16.mxu0 0
  %162 = vmatpush1.bf16.msra.mxu0 0
  %163 = vmatprep.subr.bf16.mxu0 0
  %164 = vmatpush1.bf16.msra.mxu0 0
  %165 = vmatprep.subr.bf16.mxu0 0
  %166 = vmatpush1.bf16.msra.mxu0 0
  %167 = vmatprep.subr.bf16.mxu0 0
  %168 = vmatpush1.bf16.msra.mxu0 0
  %169 = vmatprep.subr.bf16.mxu0 0
  %170 = vmatpush1.bf16.msra.mxu0 0
  %171 = vmatprep.mubr.bf16.mxu0 0
  %172 = vmatmul.mubr.bf16.gmra.mrb[0].mxu0 %v82
  %v173 = vpop.f32.mrb[0].mxu0
  %v174 = vadd.f32 0.0, %v173
  %v175 = vpop.f32.mrb[0].mxu0
  %v176 = vpop.f32.mrb[0].mxu0
  %v177 = vadd.f32 0.0, %v176
  %v178 = vpop.f32.mrb[0].mxu0
  %179 = vdwg.mxu0
  %v180 = vld [vmem:[%s5] sm:$0x1]
  %v182 = vlaneseq
  %v183 = vshrl.u32 %v182, 7
  %v184 = vsub.s32 0, %v183
  %v185 = vrot.slane %v180, %v184
  %v187 = vmul.f32 %v185, %v76
  %v188 = vmul.f32 %v185, %v77
  %v189 = vmul.f32 %v174, %v187
  %v190 = vmul.f32 %v177, %v188
  %v191 = vxor.u32 %v134, 2147483648
  %v192 = vxor.u32 %v135, 2147483648
  %v193 = vmul.f32 %v191, 1.442695
  %v194 = vpow.pop %v193
  %v195 = vmul.f32 %v192, 1.442695
  %v196 = vpow.pop %v195
  %v197 = vadd.f32 %v194, 1.0
  %v198 = vadd.f32 %v196, 1.0
  %v199 = vrcp.pop %v197
  %v200 = vmul.f32 1.0, %v199
  %v201 = vrcp.pop %v198
  %v202 = vmul.f32 1.0, %v201
  %v203 = vmul.f32 %v134, %v200
  %v204 = vmul.f32 %v135, %v202
  %v205 = vmul.f32 %v203, %v189
  %v206 = vmul.f32 %v204, %v190
  %v207 = vpack.c.bf16 %v206, %v205
  %v209 = vunpack.c.l.b16 %v207
  %v210 = vunpack.c.h.b16 %v207
  %v211 = vpack.c.b16 %v209, %v209
  %v212 = vpack.c.b16 %v210, %v210
  %vm215 = vcmask 519168
  %216 = vst.msk [vmem:[%s6] sm:$0xf] %vm215, %v211
  %217 = vst.msk [vmem:[%s6 + $0x4] sm:$0xf] %vm215, %v212
  // Predicated region
  $region26: #{_lambda_.14} parent=0 // pred_check
    _
  $region27: #{_lambda_.14} parent=0 // pred_check_branch
    %219 = sbr.rel (0) target = $region29
  $region28: #{_lambda_.14} parent=0 // pred_region
    _
  $region29: #{_lambda_.14} parent=0 // pred_fallthru
    _
  // Predicated region
  $region30: #{_lambda_.14} parent=0 // pred_check
    _
  $region31: #{_lambda_.14} parent=0 // pred_check_branch
    %221 = sbr.rel (0) target = $region33
  $region32: #{_lambda_.14} parent=0 // pred_region
    _
  $region33: #{_lambda_.14} parent=0 // pred_fallthru
    _

// kernel: _lambda_.21
$region0: #{_lambda_.21}
  #allocation0 [shape = 'u32[]', space=smem, size = 0x4, offset = 0x4, fixed_abs, tag = 'smem constant byte address 0x4 - core index']
  #allocation1 [shape = 'u32[144,128]{1,0:T(1,128)}', space=vmem, size = 0x12000, scoped, tag = 'internal scratch']
  %s0 = inlined_call_operand.vmem [shape: f32[16,32], index: 0, kind: input, shape index: {}]
  %s1 = inlined_call_operand.vmem [shape: f32[1,32], index: 1, kind: input, shape index: {}]
  %s2 = inlined_call_operand.hbm [shape: f32[16,32], index: 2, kind: output, shape index: {}]
  %s3 = sld [smem:[#allocation0]]
  $region18: #{_lambda_.21} parent=0
    _
  %s5 = ssub.s32 1, %s3
  %s6 = scalar_select 0, %s5, %s3
  $region1: #{_lambda_.21} parent=0
    #allocation2 [shape = 'u8[8192]{0}', space=vmem, size = 0x2000, scoped, tag = 'output window, operand 0, single buffered']
    #allocation3 [shape = 's32[1]{0}', space=sflag, size = 0x4, scoped, tag = 'scoped memory for _lambda_.21']
    %7 = vsyncpa [#allocation3], 0
    // Predicated region
    $region2: #{_lambda_.21} parent=1 // pred_check
      _
    $region3: #{_lambda_.21} parent=1 // pred_check_branch
      %9 = sbr.rel (0) target = $region5
    $region4: #{_lambda_.21} parent=1 // pred_region
      _
    $region5: #{_lambda_.21} parent=1 // pred_fallthru
      _
    // Predicated region
    $region6: #{_lambda_.21} parent=1 // pred_check
      _
    $region7: #{_lambda_.21} parent=1 // pred_check_branch
      %11 = sbr.rel (0) target = $region9
    $region8: #{_lambda_.21} parent=1 // pred_region
      _
    $region9: #{_lambda_.21} parent=1 // pred_fallthru
      _
    %v12 = vld [vmem:[%s0] sm:$0xff]
    %v13 = vld [vmem:[%s0 + $0x8] sm:$0xff]
    %v14 = vld [vmem:[%s1] sm:$0x1]
    %v15 = vmul.f32 %v12, %v12
    %v16 = vmul.f32 %v13, %v13
    %vm17 = vcmask 261120
    %v18 = vsel %vm17, %v15, 0.0
    %19 = vadd.xlane.f32.xlu0 %v18
    %v20 = vpop.xlane.xlu0 %19
    %v21 = vsel %vm17, %v16, 0.0
    %22 = vadd.xlane.f32.xlu0 %v21
    %v23 = vpop.xlane.xlu0 %22
    %v24 = vrcp.pop 32.0
    %v25 = vmul.f32 %v20, %v24
    %v26 = vmul.f32 %v23, %v24
    %v27 = vadd.f32 %v25, 1e-06
    %v28 = vadd.f32 %v26, 1e-06
    %v29 = vrsqrt.pop %v27
    %v30 = vrsqrt.pop %v28
    %v31 = vmul.f32 %v12, %v29
    %v32 = vmul.f32 %v13, %v30
    %v34 = vlaneseq
    %v35 = vshrl.u32 %v34, 7
    %v36 = vsub.s32 0, %v35
    %v37 = vrot.slane %v14, %v36
    %v39 = vmul.f32 %v31, %v37
    %v40 = vmul.f32 %v32, %v37
    %41 = vst.msk [vmem:[#allocation2] sm:$0xff] %vm17, %v39
    %42 = vst.msk [vmem:[#allocation2 + $0x8] sm:$0xff] %vm17, %v40
    // Predicated region
    $region10: #{_lambda_.21} parent=1 // pred_check
      _
    $region11: #{_lambda_.21} parent=1 // pred_check_branch
      %44 = sbr.rel (0) target = $region13
    $region12: #{_lambda_.21} parent=1 // pred_region
      %s46 = ssub.s32 256, 256
      %47 = vsyncadd [#allocation3], %s46
      %s48 = sshll.u32 [#allocation2], 4
      %s49 = int_to_ptr.vmem [resolvable:$true] %s48
      %54 = dma.vmem_to_hbm [thread:$0]  %s49, 256, %s2, [#allocation3], 128, 128, 8
    $region13: #{_lambda_.21} parent=1 // pred_fallthru
      _
    // Predicated region
    $region14: #{_lambda_.21} parent=1 // pred_check
      _
    $region15: #{_lambda_.21} parent=1 // pred_check_branch
      %56 = sbr.rel (0) target = $region17
    $region16: #{_lambda_.21} parent=1 // pred_region
      %57 = dma.done [#allocation3], 256
    $region17: #{_lambda_.21} parent=1 // pred_fallthru
      _
    %58 = vsyncpa [#allocation3], 1

// kernel: _lambda_.15
$region0: #{_lambda_.15}
  #allocation0 [shape = 'u32[]', space=smem, size = 0x4, offset = 0x4, fixed_abs, tag = 'smem constant byte address 0x4 - core index']
  #allocation1 [shape = 'u32[144,128]{1,0:T(1,128)}', space=vmem, size = 0x12000, scoped, tag = 'internal scratch']
  %s0 = inlined_call_operand.vmem [shape: bf16[16,64], index: 0, kind: input, shape index: {}]
  %s1 = inlined_call_operand.vmem [shape: s8[64,32], index: 1, kind: input, shape index: {}]
  %s2 = inlined_call_operand.vmem [shape: f32[1,32], index: 2, kind: input, shape index: {}]
  %s3 = inlined_call_operand.vmem [shape: f32[16,32], index: 3, kind: input, shape index: {}]
  %s4 = inlined_call_operand.vmem [shape: f32[16,32], index: 4, kind: output, shape index: {}]
  %s5 = sld [smem:[#allocation0]]
  $region26: #{_lambda_.15} parent=0
    _
  %s7 = ssub.s32 1, %s5
  %s8 = scalar_select 0, %s7, %s5
  // Predicated region
  $region2: #{_lambda_.15} parent=0 // pred_check
    _
  $region3: #{_lambda_.15} parent=0 // pred_check_branch
    %10 = sbr.rel (0) target = $region5
  $region4: #{_lambda_.15} parent=0 // pred_region
    _
  $region5: #{_lambda_.15} parent=0 // pred_fallthru
    _
  // Predicated region
  $region6: #{_lambda_.15} parent=0 // pred_check
    _
  $region7: #{_lambda_.15} parent=0 // pred_check_branch
    %12 = sbr.rel (0) target = $region9
  $region8: #{_lambda_.15} parent=0 // pred_region
    _
  $region9: #{_lambda_.15} parent=0 // pred_fallthru
    _
  // Predicated region
  $region10: #{_lambda_.15} parent=0 // pred_check
    _
  $region11: #{_lambda_.15} parent=0 // pred_check_branch
    %14 = sbr.rel (0) target = $region13
  $region12: #{_lambda_.15} parent=0 // pred_region
    _
  $region13: #{_lambda_.15} parent=0 // pred_fallthru
    _
  // Predicated region
  $region14: #{_lambda_.15} parent=0 // pred_check
    _
  $region15: #{_lambda_.15} parent=0 // pred_check_branch
    %16 = sbr.rel (0) target = $region17
  $region16: #{_lambda_.15} parent=0 // pred_region
    _
  $region17: #{_lambda_.15} parent=0 // pred_fallthru
    _
  %v18 = vld [vmem:[%s0] sm:$0xf]
  %v19 = vld [vmem:[%s0 + $0x4] sm:$0xf]
  %v20 = vunpack.c.l.bf16 %v18
  %v21 = vunpack.c.l.bf16 %v19
  %v22 = vand.u32 2147483647, %v20
  %v23 = vand.u32 2147483647, %v21
  %vm24 = vcmask 523264
  %v25 = vsel %vm24, %v22, -inf
  %26 = vmax.xlane.f32.xlu0 %v25
  %v27 = vpop.xlane.xlu0 %26
  %v28 = vsel %vm24, %v23, -inf
  %29 = vmax.xlane.f32.xlu0 %v28
  %v30 = vpop.xlane.xlu0 %29
  %v31 = vmax.f32 %v27, 1e-05
  %v32 = vmax.f32 %v30, 1e-05
  %v33 = vrcp.pop %v31
  %v34 = vmul.f32 127.0, %v33
  %v35 = vrcp.pop %v32
  %v36 = vmul.f32 127.0, %v35
  %v37 = vmul.f32 %v20, %v34
  %v38 = vmul.f32 %v21, %v36
  %v39 = vround.ne.pseudo %v37
  %v40 = vround.ne.pseudo %v38
  %v41 = vmax.f32 %v39, -128.0
  %v42 = vmax.f32 %v40, -128.0
  %v43 = vmin.f32 %v41, 127.0
  %v44 = vmin.f32 %v42, 127.0
  %v45 = vpack.c.bf16 %v44, %v43
  %v46 = vmul.f32 %v31, 0.007874016
  %v47 = vmul.f32 %v32, 0.007874016
  %v48 = vld [vmem:[%s1] sm:$0xff]
  %v49 = vld [vmem:[%s1 + $0x8] sm:$0xff]
  %v50 = vunpack.c.l.s8.bf16 %v48
  %v51 = vunpack.c.h.s8.bf16 %v48
  %v52 = vunpack.c.l.s8.bf16 %v49
  %v53 = vunpack.c.h.s8.bf16 %v49
  %v55 = vsel %vm24, %v45, 0
  %57 = vmatprep.subr.bf16.mxu0 0
  %58 = vmatpush1.bf16.msra.mxu0 %v50
  %59 = vmatprep.subr.bf16.mxu0 0
  %60 = vmatpush1.bf16.msra.mxu0 %v51
  %61 = vmatprep.subr.bf16.mxu0 0
  %62 = vmatpush1.bf16.msra.mxu0 %v52
  %63 = vmatprep.subr.bf16.mxu0 0
  %64 = vmatpush1.bf16.msra.mxu0 %v53
  %65 = vmatprep.subr.bf16.mxu0 0
  %66 = vmatpush1.bf16.msra.mxu0 0
  %67 = vmatprep.subr.bf16.mxu0 0
  %68 = vmatpush1.bf16.msra.mxu0 0
  %69 = vmatprep.subr.bf16.mxu0 0
  %70 = vmatpush1.bf16.msra.mxu0 0
  %71 = vmatprep.subr.bf16.mxu0 0
  %72 = vmatpush1.bf16.msra.mxu0 0
  %73 = vmatprep.subr.bf16.mxu0 0
  %74 = vmatpush1.bf16.msra.mxu0 0
  %75 = vmatprep.subr.bf16.mxu0 0
  %76 = vmatpush1.bf16.msra.mxu0 0
  %77 = vmatprep.subr.bf16.mxu0 0
  %78 = vmatpush1.bf16.msra.mxu0 0
  %79 = vmatprep.subr.bf16.mxu0 0
  %80 = vmatpush1.bf16.msra.mxu0 0
  %81 = vmatprep.subr.bf16.mxu0 0
  %82 = vmatpush1.bf16.msra.mxu0 0
  %83 = vmatprep.subr.bf16.mxu0 0
  %84 = vmatpush1.bf16.msra.mxu0 0
  %85 = vmatprep.subr.bf16.mxu0 0
  %86 = vmatpush1.bf16.msra.mxu0 0
  %87 = vmatprep.subr.bf16.mxu0 0
  %88 = vmatpush1.bf16.msra.mxu0 0
  %89 = vmatprep.mubr.bf16.mxu0 0
  %90 = vmatmul.mubr.bf16.gmra.mrb[0].mxu0 %v55
  %v91 = vpop.f32.mrb[0].mxu0
  %v92 = vadd.f32 0.0, %v91
  %v93 = vpop.f32.mrb[0].mxu0
  %v94 = vpop.f32.mrb[0].mxu0
  %v95 = vadd.f32 0.0, %v94
  %v96 = vpop.f32.mrb[0].mxu0
  %97 = vdwg.mxu0
  %v98 = vld [vmem:[%s3] sm:$0xff]
  %v99 = vld [vmem:[%s3 + $0x8] sm:$0xff]
  %v100 = vld [vmem:[%s2] sm:$0x1]
  %v102 = vlaneseq
  %v103 = vshrl.u32 %v102, 7
  %v104 = vsub.s32 0, %v103
  %v105 = vrot.slane %v100, %v104
  %v107 = vmul.f32 %v92, %v105
  %v108 = vmul.f32 %v95, %v105
  %v109 = vmul.f32 %v107, %v46
  %v110 = vmul.f32 %v108, %v47
  %v111 = vadd.f32 %v98, %v109
  %v112 = vadd.f32 %v99, %v110
  %vm113 = vcmask 261120
  %114 = vst.msk [vmem:[%s4] sm:$0xff] %vm113, %v111
  %115 = vst.msk [vmem:[%s4 + $0x8] sm:$0xff] %vm113, %v112
  // Predicated region
  $region18: #{_lambda_.15} parent=0 // pred_check
    _
  $region19: #{_lambda_.15} parent=0 // pred_check_branch
    %117 = sbr.rel (0) target = $region21
  $region20: #{_lambda_.15} parent=0 // pred_region
    _
  $region21: #{_lambda_.15} parent=0 // pred_fallthru
    _
  // Predicated region
  $region22: #{_lambda_.15} parent=0 // pred_check
    _
  $region23: #{_lambda_.15} parent=0 // pred_check_branch
    %119 = sbr.rel (0) target = $region25
  $region24: #{_lambda_.15} parent=0 // pred_region
    _
  $region25: #{_lambda_.15} parent=0 // pred_fallthru
    _

</llo_original>
